<compile_context>
chip_gen: v5e
topology: v5e:2x2
jax: 0.10.0
libtpu: 0.0.40
codegen_flags: <defaults>
</compile_context>

<pallas_src>
import jax
import jax.numpy as jnp
from jax.experimental import pallas as pl
from jax.experimental.pallas import tpu as pltpu

LANE = 128
TM_CAP = 512


def _ceil_to(x, m):
    return -(-x // m) * m


def _pad2d(x, rows, cols):
    r, c = x.shape
    return jnp.pad(x, ((0, rows - r), (0, cols - c)))


def _pick_tm(m):
    # multiple of 8 (sublane), capped so blocks always fit comfortably in VMEM
    return min(TM_CAP, _ceil_to(m, 8))


# ---------------- fused conv (matmul) + bias + relu + 2x2 max-pool ----------------

def _conv_mm_pool_kernel(x_ref, w_ref, b_ref, o_ref):
    # One pool position per step of the last (arbitrary) grid axis; the output
    # tile stays resident in VMEM and takes a running max.
    p = pl.program_id(1)
    y = jnp.dot(x_ref[...], w_ref[...], preferred_element_type=jnp.float32)
    y = jnp.maximum(y + b_ref[...], 0.0)

    @pl.when(p == 0)
    def _():
        o_ref[...] = y

    @pl.when(p > 0)
    def _():
        o_ref[...] = jnp.maximum(o_ref[...], y)


def _im2col_pool_major(x, kh, kw):
    """im2col with rows ordered (pool_dh, pool_dw, N, PH, PW) -> (4, N*PH*PW, K)."""
    N, H, W, C = x.shape
    OH, OW = H - kh + 1, W - kw + 1
    PH, PW = OH // 2, OW // 2
    K = kh * kw * C
    cols = [x[:, i:i + OH, j:j + OW, :] for i in range(kh) for j in range(kw)]
    patches = jnp.stack(cols, axis=3).reshape(N, OH, OW, K)      # (N, OH, OW, K)
    patches = patches.reshape(N, PH, 2, PW, 2, K)                # (N, PH, dh, PW, dw, K)
    patches = jnp.transpose(patches, (2, 4, 0, 1, 3, 5))         # (dh, dw, N, PH, PW, K)
    return patches.reshape(4, N * PH * PW, K), (N, PH, PW)


def conv2d_relu_pool(x_nhwc, w_oihw, b, kh=5, kw=5):
    """maxpool2x2(relu(conv_valid(x, w) + b)) in a single pallas_call."""
    cout, cin = w_oihw.shape[0], w_oihw.shape[1]
    patches, (N, PH, PW) = _im2col_pool_major(x_nhwc, kh, kw)    # (4, M, K)
    _, M, K = patches.shape
    Kp = _ceil_to(K, LANE)
    Np = _ceil_to(cout, LANE)
    tm = _pick_tm(M)
    Mp = _ceil_to(M, tm)

    x_p = jnp.pad(patches, ((0, 0), (0, Mp - M), (0, Kp - K))).astype(jnp.bfloat16)
    w_mat = jnp.transpose(w_oihw, (2, 3, 1, 0)).reshape(kh * kw * cin, cout)
    w_p = _pad2d(w_mat, Kp, Np).astype(jnp.bfloat16)
    b_p = jnp.pad(b, (0, Np - cout)).reshape(1, Np).astype(jnp.float32)

    flops = 2 * 4 * Mp * Kp * Np
    bytes_accessed = 4 * Mp * Kp * 2 + Kp * Np * 2 + Np * 4 + Mp * Np * 4

    out = pl.pallas_call(
        _conv_mm_pool_kernel,
        out_shape=jax.ShapeDtypeStruct((Mp, Np), jnp.float32),
        grid=(Mp // tm, 4),
        in_specs=[
            pl.BlockSpec((None, tm, Kp), lambda i, p: (p, i, 0)),
            pl.BlockSpec((Kp, Np), lambda i, p: (0, 0)),
            pl.BlockSpec((1, Np), lambda i, p: (0, 0)),
        ],
        out_specs=pl.BlockSpec((tm, Np), lambda i, p: (i, 0)),
        compiler_params=pltpu.CompilerParams(
            dimension_semantics=("parallel", "arbitrary")),
        cost_estimate=pl.CostEstimate(flops=flops, transcendentals=0,
                                      bytes_accessed=bytes_accessed),
    )(x_p, w_p, b_p)
    return out[:M, :cout].reshape(N, PH, PW, cout)


# ------------------------- fused FC chain kernel -------------------------

def _fc_fused_kernel(h_ref, w1_ref, b1_ref, w2_ref, b2_ref, w3_ref, b3_ref, o_ref):
    # z1 = relu(h @ w1 + b1); z2 = relu(z1 @ w2 + b2); out = relu(z2 @ w3 + b3)
    # Weights + intermediates stay in VMEM/vregs; zero-padded cols stay zero
    # through relu, so padding is exact.
    z = jnp.dot(h_ref[...], w1_ref[...], preferred_element_type=jnp.float32)
    z = jnp.maximum(z + b1_ref[...], 0.0)
    z = jnp.dot(z.astype(jnp.bfloat16), w2_ref[...], preferred_element_type=jnp.float32)
    z = jnp.maximum(z + b2_ref[...], 0.0)
    z = jnp.dot(z.astype(jnp.bfloat16), w3_ref[...], preferred_element_type=jnp.float32)
    o_ref[...] = jnp.maximum(z + b3_ref[...], 0.0)


def fc_chain_relu(h, w1, b1, w2, b2, w3, b3):
    """Single pallas_call computing relu(fc3(relu(fc2(relu(fc1(h))))))."""
    M, K = h.shape
    n1, n2, n3 = w1.shape[1], w2.shape[1], w3.shape[1]
    Kp = _ceil_to(K, LANE)
    N1, N2, N3 = (_ceil_to(n, LANE) for n in (n1, n2, n3))
    tm = _pick_tm(M)
    Mp = _ceil_to(M, tm)

    h_p = _pad2d(h, Mp, Kp).astype(jnp.bfloat16)
    w1_p = _pad2d(w1, Kp, N1).astype(jnp.bfloat16)
    w2_p = _pad2d(w2, N1, N2).astype(jnp.bfloat16)
    w3_p = _pad2d(w3, N2, N3).astype(jnp.bfloat16)
    b1_p = jnp.pad(b1, (0, N1 - n1)).reshape(1, N1).astype(jnp.float32)
    b2_p = jnp.pad(b2, (0, N2 - n2)).reshape(1, N2).astype(jnp.float32)
    b3_p = jnp.pad(b3, (0, N3 - n3)).reshape(1, N3).astype(jnp.float32)

    out = pl.pallas_call(
        _fc_fused_kernel,
        out_shape=jax.ShapeDtypeStruct((Mp, N3), jnp.float32),
        grid=(Mp // tm,),
        in_specs=[
            pl.BlockSpec((tm, Kp), lambda i: (i, 0)),
            pl.BlockSpec((Kp, N1), lambda i: (0, 0)),
            pl.BlockSpec((1, N1), lambda i: (0, 0)),
            pl.BlockSpec((N1, N2), lambda i: (0, 0)),
            pl.BlockSpec((1, N2), lambda i: (0, 0)),
            pl.BlockSpec((N2, N3), lambda i: (0, 0)),
            pl.BlockSpec((1, N3), lambda i: (0, 0)),
        ],
        out_specs=pl.BlockSpec((tm, N3), lambda i: (i, 0)),
        compiler_params=pltpu.CompilerParams(
            dimension_semantics=("parallel",)),
    )(h_p, w1_p, b1_p, w2_p, b2_p, w3_p, b3_p)
    return out[:M, :n3]


# ------------------------- parameters & forward -------------------------

def init_params(key):
    ks = jax.random.split(key, 10)

    def u(k, shape, fan_in):
        bound = 1.0 / jnp.sqrt(jnp.float32(fan_in))
        return jax.random.uniform(k, shape, jnp.float32, -bound, bound)

    return {
        "conv1_w": u(ks[0], (6, 3, 5, 5), 3 * 25),
        "conv1_b": u(ks[1], (6,), 3 * 25),
        "conv2_w": u(ks[2], (16, 6, 5, 5), 6 * 25),
        "conv2_b": u(ks[3], (16,), 6 * 25),
        # linear weights stored directly as (in, out)
        "fc1_w": u(ks[4], (256, 120), 256),
        "fc1_b": u(ks[5], (120,), 256),
        "fc2_w": u(ks[6], (120, 84), 120),
        "fc2_b": u(ks[7], (84,), 120),
        "fc3_w": u(ks[8], (84, 10), 84),
        "fc3_b": u(ks[9], (10,), 84),
    }


def net_forward(params, x_nchw):
    N = x_nchw.shape[0]
    x = jnp.transpose(x_nchw, (0, 2, 3, 1))                          # NCHW -> NHWC
    y = conv2d_relu_pool(x, params["conv1_w"], params["conv1_b"])    # (N, 12, 12, 6)
    y = conv2d_relu_pool(y, params["conv2_w"], params["conv2_b"])    # (N, 4, 4, 16)
    # PyTorch flattens NCHW: (N, C*H*W) = (N, 256)
    h = jnp.transpose(y, (0, 3, 1, 2)).reshape(N, -1)
    # TODO(synk): the im2col patch extraction / NCHW flatten transpose stay in
    # plain JAX (layout plumbing XLA fuses); no clean standalone Pallas win.
    z = fc_chain_relu(h,
                      params["fc1_w"], params["fc1_b"],
                      params["fc2_w"], params["fc2_b"],
                      params["fc3_w"], params["fc3_b"])              # (N, 10) (relu5 applied)
    return z, h


if __name__ == "__main__":
    key = jax.random.PRNGKey(0)
    k_param, k_x = jax.random.split(key)
    params = init_params(k_param)
    # fc1 in_features=256 => input spatial must be 28x28 (3 channels)
    x = jax.random.normal(k_x, (2, 3, 28, 28), dtype=jnp.float32)

    fwd = jax.jit(net_forward)
    y, h = fwd(params, x)
    jax.block_until_ready((y, h))

    assert y.shape == (2, 10) and h.shape == (2, 256)
    assert bool(jnp.all(jnp.isfinite(y))) and bool(jnp.all(y >= 0.0))
    assert bool(jnp.all(jnp.isfinite(h))) and bool(jnp.all(h >= 0.0))
    print("KERNEL_OK")
</pallas_src>

<mosaic_0001>
module attributes {stable_mosaic.version = 11 : i64} {
  func.func @_conv_mm_pool_kernel(%arg0: i32, %arg1: i32, %arg2: memref<1x288x128xbf16, #tpu.memory_space<vmem>>, %arg3: memref<128x128xbf16, #tpu.memory_space<vmem>>, %arg4: memref<1x128xf32, #tpu.memory_space<vmem>>, %arg5: memref<288x128xf32, #tpu.memory_space<vmem>>) attributes {dimension_semantics = [#tpu.dimension_semantics<parallel>, #tpu.dimension_semantics<arbitrary>], iteration_bounds = array<i64: 1, 4>, scalar_prefetch = 0 : i64, scratch_operands = 0 : i64, tpu.core_type = #tpu.core_type<tc>, window_params = [{transform_indices = @transform_0, window_bounds = array<i64: 1, 288, 128>}, {pipeline_mode = #tpu.pipeline_mode<synchronous>, transform_indices = @transform_1, window_bounds = array<i64: 128, 128>}, {pipeline_mode = #tpu.pipeline_mode<synchronous>, transform_indices = @transform_2, window_bounds = array<i64: 1, 128>}, {transform_indices = @transform_3, window_bounds = array<i64: 288, 128>}]} {
    %c0 = arith.constant 0 : index
    %c0_0 = arith.constant 0 : index
    %c0_1 = arith.constant 0 : index
    %0 = vector.load %arg2[%c0, %c0_0, %c0_1] : memref<1x288x128xbf16, #tpu.memory_space<vmem>>, vector<1x288x128xbf16>
    %1 = vector.shape_cast %0 : vector<1x288x128xbf16> to vector<288x128xbf16>
    %c0_2 = arith.constant 0 : index
    %c0_3 = arith.constant 0 : index
    %2 = vector.load %arg3[%c0_2, %c0_3] : memref<128x128xbf16, #tpu.memory_space<vmem>>, vector<128x128xbf16>
    %cst = arith.constant dense<0.000000e+00> : vector<288x128xf32>
    %3 = tpu.matmul %1, %2, %cst {dimension_numbers = #tpu.dot_dimension_numbers<[1], [0], [0], [1], [0, 0, 1, 1], [], []>} : vector<288x128xbf16>, vector<128x128xbf16>, vector<288x128xf32> -> vector<288x128xf32>
    %c0_4 = arith.constant 0 : index
    %c0_5 = arith.constant 0 : index
    %4 = vector.load %arg4[%c0_4, %c0_5] : memref<1x128xf32, #tpu.memory_space<vmem>>, vector<1x128xf32>
    %5 = vector.broadcast %4 : vector<1x128xf32> to vector<288x128xf32>
    %6 = arith.addf %3, %5 : vector<288x128xf32>
    %cst_6 = arith.constant 0.000000e+00 : f32
    %7 = vector.broadcast %cst_6 : f32 to vector<288x128xf32>
    %8 = arith.maximumf %6, %7 : vector<288x128xf32>
    %c0_i32 = arith.constant 0 : i32
    %9 = arith.cmpi eq, %arg1, %c0_i32 : i32
    %10 = arith.extui %9 : i1 to i32
    %c0_i32_7 = arith.constant 0 : i32
    %11 = arith.cmpi ne, %10, %c0_i32_7 : i32
    scf.if %11 {
      %c0_10 = arith.constant 0 : index
      %c0_11 = arith.constant 0 : index
      %15 = vector.load %arg5[%c0_10, %c0_11] : memref<288x128xf32, #tpu.memory_space<vmem>>, vector<288x128xf32>
      tpu.vector_store %arg5[%c0_10, %c0_11], %8 {strides = array<i32>} : memref<288x128xf32, #tpu.memory_space<vmem>>, vector<288x128xf32>,
    } else {
    }
    %c0_i32_8 = arith.constant 0 : i32
    %12 = arith.cmpi sgt, %arg1, %c0_i32_8 : i32
    %13 = arith.extui %12 : i1 to i32
    %c0_i32_9 = arith.constant 0 : i32
    %14 = arith.cmpi ne, %13, %c0_i32_9 : i32
    scf.if %14 {
      %c0_10 = arith.constant 0 : index
      %c0_11 = arith.constant 0 : index
      %15 = vector.load %arg5[%c0_10, %c0_11] : memref<288x128xf32, #tpu.memory_space<vmem>>, vector<288x128xf32>
      %16 = arith.maximumf %15, %8 : vector<288x128xf32>
      %c0_12 = arith.constant 0 : index
      %c0_13 = arith.constant 0 : index
      %17 = vector.load %arg5[%c0_12, %c0_13] : memref<288x128xf32, #tpu.memory_space<vmem>>, vector<288x128xf32>
      tpu.vector_store %arg5[%c0_12, %c0_13], %16 {strides = array<i32>} : memref<288x128xf32, #tpu.memory_space<vmem>>, vector<288x128xf32>,
    } else {
    }
    return
  }
  func.func @transform_0(%arg0: i32, %arg1: i32) -> (i32, i32, i32) {
    %c0_i32 = arith.constant 0 : i32
    %c0_i32_0 = arith.constant 0 : i32
    return %arg1, %arg0, %c0_i32 : i32, i32, i32
  }
  func.func @transform_1(%arg0: i32, %arg1: i32) -> (i32, i32) {
    %c0_i32 = arith.constant 0 : i32
    %c0_i32_0 = arith.constant 0 : i32
    %c0_i32_1 = arith.constant 0 : i32
    return %c0_i32, %c0_i32_0 : i32, i32
  }
  func.func @transform_2(%arg0: i32, %arg1: i32) -> (i32, i32) {
    %c0_i32 = arith.constant 0 : i32
    %c0_i32_0 = arith.constant 0 : i32
    %c0_i32_1 = arith.constant 0 : i32
    return %c0_i32, %c0_i32_0 : i32, i32
  }
  func.func @transform_3(%arg0: i32, %arg1: i32) -> (i32, i32) {
    %c0_i32 = arith.constant 0 : i32
    %c0_i32_0 = arith.constant 0 : i32
    return %arg0, %c0_i32 : i32, i32
  }
}

module attributes {stable_mosaic.version = 11 : i64} {
  func.func @_conv_mm_pool_kernel(%arg0: i32, %arg1: i32, %arg2: memref<1x32x256xbf16, #tpu.memory_space<vmem>>, %arg3: memref<256x128xbf16, #tpu.memory_space<vmem>>, %arg4: memref<1x128xf32, #tpu.memory_space<vmem>>, %arg5: memref<32x128xf32, #tpu.memory_space<vmem>>) attributes {dimension_semantics = [#tpu.dimension_semantics<parallel>, #tpu.dimension_semantics<arbitrary>], iteration_bounds = array<i64: 1, 4>, scalar_prefetch = 0 : i64, scratch_operands = 0 : i64, tpu.core_type = #tpu.core_type<tc>, window_params = [{transform_indices = @transform_0, window_bounds = array<i64: 1, 32, 256>}, {pipeline_mode = #tpu.pipeline_mode<synchronous>, transform_indices = @transform_1, window_bounds = array<i64: 256, 128>}, {pipeline_mode = #tpu.pipeline_mode<synchronous>, transform_indices = @transform_2, window_bounds = array<i64: 1, 128>}, {transform_indices = @transform_3, window_bounds = array<i64: 32, 128>}]} {
    %c0 = arith.constant 0 : index
    %c0_0 = arith.constant 0 : index
    %c0_1 = arith.constant 0 : index
    %0 = vector.load %arg2[%c0, %c0_0, %c0_1] : memref<1x32x256xbf16, #tpu.memory_space<vmem>>, vector<1x32x256xbf16>
    %1 = vector.shape_cast %0 : vector<1x32x256xbf16> to vector<32x256xbf16>
    %c0_2 = arith.constant 0 : index
    %c0_3 = arith.constant 0 : index
    %2 = vector.load %arg3[%c0_2, %c0_3] : memref<256x128xbf16, #tpu.memory_space<vmem>>, vector<256x128xbf16>
    %cst = arith.constant dense<0.000000e+00> : vector<32x128xf32>
    %3 = tpu.matmul %1, %2, %cst {dimension_numbers = #tpu.dot_dimension_numbers<[1], [0], [0], [1], [0, 0, 1, 1], [], []>} : vector<32x256xbf16>, vector<256x128xbf16>, vector<32x128xf32> -> vector<32x128xf32>
    %c0_4 = arith.constant 0 : index
    %c0_5 = arith.constant 0 : index
    %4 = vector.load %arg4[%c0_4, %c0_5] : memref<1x128xf32, #tpu.memory_space<vmem>>, vector<1x128xf32>
    %5 = vector.broadcast %4 : vector<1x128xf32> to vector<32x128xf32>
    %6 = arith.addf %3, %5 : vector<32x128xf32>
    %cst_6 = arith.constant 0.000000e+00 : f32
    %7 = vector.broadcast %cst_6 : f32 to vector<32x128xf32>
    %8 = arith.maximumf %6, %7 : vector<32x128xf32>
    %c0_i32 = arith.constant 0 : i32
    %9 = arith.cmpi eq, %arg1, %c0_i32 : i32
    %10 = arith.extui %9 : i1 to i32
    %c0_i32_7 = arith.constant 0 : i32
    %11 = arith.cmpi ne, %10, %c0_i32_7 : i32
    scf.if %11 {
      %c0_10 = arith.constant 0 : index
      %c0_11 = arith.constant 0 : index
      %15 = vector.load %arg5[%c0_10, %c0_11] : memref<32x128xf32, #tpu.memory_space<vmem>>, vector<32x128xf32>
      tpu.vector_store %arg5[%c0_10, %c0_11], %8 {strides = array<i32>} : memref<32x128xf32, #tpu.memory_space<vmem>>, vector<32x128xf32>,
    } else {
    }
    %c0_i32_8 = arith.constant 0 : i32
    %12 = arith.cmpi sgt, %arg1, %c0_i32_8 : i32
    %13 = arith.extui %12 : i1 to i32
    %c0_i32_9 = arith.constant 0 : i32
    %14 = arith.cmpi ne, %13, %c0_i32_9 : i32
    scf.if %14 {
      %c0_10 = arith.constant 0 : index
      %c0_11 = arith.constant 0 : index
      %15 = vector.load %arg5[%c0_10, %c0_11] : memref<32x128xf32, #tpu.memory_space<vmem>>, vector<32x128xf32>
      %16 = arith.maximumf %15, %8 : vector<32x128xf32>
      %c0_12 = arith.constant 0 : index
      %c0_13 = arith.constant 0 : index
      %17 = vector.load %arg5[%c0_12, %c0_13] : memref<32x128xf32, #tpu.memory_space<vmem>>, vector<32x128xf32>
      tpu.vector_store %arg5[%c0_12, %c0_13], %16 {strides = array<i32>} : memref<32x128xf32, #tpu.memory_space<vmem>>, vector<32x128xf32>,
    } else {
    }
    return
  }
  func.func @transform_0(%arg0: i32, %arg1: i32) -> (i32, i32, i32) {
    %c0_i32 = arith.constant 0 : i32
    %c0_i32_0 = arith.constant 0 : i32
    return %arg1, %arg0, %c0_i32 : i32, i32, i32
  }
  func.func @transform_1(%arg0: i32, %arg1: i32) -> (i32, i32) {
    %c0_i32 = arith.constant 0 : i32
    %c0_i32_0 = arith.constant 0 : i32
    %c0_i32_1 = arith.constant 0 : i32
    return %c0_i32, %c0_i32_0 : i32, i32
  }
  func.func @transform_2(%arg0: i32, %arg1: i32) -> (i32, i32) {
    %c0_i32 = arith.constant 0 : i32
    %c0_i32_0 = arith.constant 0 : i32
    %c0_i32_1 = arith.constant 0 : i32
    return %c0_i32, %c0_i32_0 : i32, i32
  }
  func.func @transform_3(%arg0: i32, %arg1: i32) -> (i32, i32) {
    %c0_i32 = arith.constant 0 : i32
    %c0_i32_0 = arith.constant 0 : i32
    return %arg0, %c0_i32 : i32, i32
  }
}

module attributes {stable_mosaic.version = 11 : i64} {
  func.func @_fc_fused_kernel(%arg0: i32, %arg1: memref<8x256xbf16, #tpu.memory_space<vmem>>, %arg2: memref<256x128xbf16, #tpu.memory_space<vmem>>, %arg3: memref<1x128xf32, #tpu.memory_space<vmem>>, %arg4: memref<128x128xbf16, #tpu.memory_space<vmem>>, %arg5: memref<1x128xf32, #tpu.memory_space<vmem>>, %arg6: memref<128x128xbf16, #tpu.memory_space<vmem>>, %arg7: memref<1x128xf32, #tpu.memory_space<vmem>>, %arg8: memref<8x128xf32, #tpu.memory_space<vmem>>) attributes {dimension_semantics = [#tpu.dimension_semantics<parallel>], iteration_bounds = array<i64: 1>, scalar_prefetch = 0 : i64, scratch_operands = 0 : i64, tpu.core_type = #tpu.core_type<tc>, window_params = [{transform_indices = @transform_0, window_bounds = array<i64: 8, 256>}, {pipeline_mode = #tpu.pipeline_mode<synchronous>, transform_indices = @transform_1, window_bounds = array<i64: 256, 128>}, {pipeline_mode = #tpu.pipeline_mode<synchronous>, transform_indices = @transform_2, window_bounds = array<i64: 1, 128>}, {pipeline_mode = #tpu.pipeline_mode<synchronous>, transform_indices = @transform_3, window_bounds = array<i64: 128, 128>}, {pipeline_mode = #tpu.pipeline_mode<synchronous>, transform_indices = @transform_4, window_bounds = array<i64: 1, 128>}, {pipeline_mode = #tpu.pipeline_mode<synchronous>, transform_indices = @transform_5, window_bounds = array<i64: 128, 128>}, {pipeline_mode = #tpu.pipeline_mode<synchronous>, transform_indices = @transform_6, window_bounds = array<i64: 1, 128>}, {transform_indices = @transform_7, window_bounds = array<i64: 8, 128>}]} {
    %c0 = arith.constant 0 : index
    %c0_0 = arith.constant 0 : index
    %0 = vector.load %arg1[%c0, %c0_0] : memref<8x256xbf16, #tpu.memory_space<vmem>>, vector<8x256xbf16>
    %c0_1 = arith.constant 0 : index
    %c0_2 = arith.constant 0 : index
    %1 = vector.load %arg2[%c0_1, %c0_2] : memref<256x128xbf16, #tpu.memory_space<vmem>>, vector<256x128xbf16>
    %cst = arith.constant dense<0.000000e+00> : vector<8x128xf32>
    %2 = tpu.matmul %0, %1, %cst {dimension_numbers = #tpu.dot_dimension_numbers<[1], [0], [0], [1], [0, 0, 1, 1], [], []>} : vector<8x256xbf16>, vector<256x128xbf16>, vector<8x128xf32> -> vector<8x128xf32>
    %c0_3 = arith.constant 0 : index
    %c0_4 = arith.constant 0 : index
    %3 = vector.load %arg3[%c0_3, %c0_4] : memref<1x128xf32, #tpu.memory_space<vmem>>, vector<1x128xf32>
    %4 = vector.broadcast %3 : vector<1x128xf32> to vector<8x128xf32>
    %5 = arith.addf %2, %4 : vector<8x128xf32>
    %cst_5 = arith.constant 0.000000e+00 : f32
    %6 = vector.broadcast %cst_5 : f32 to vector<8x128xf32>
    %7 = arith.maximumf %5, %6 : vector<8x128xf32>
    %8 = arith.truncf %7 : vector<8x128xf32> to vector<8x128xbf16>
    %c0_6 = arith.constant 0 : index
    %c0_7 = arith.constant 0 : index
    %9 = vector.load %arg4[%c0_6, %c0_7] : memref<128x128xbf16, #tpu.memory_space<vmem>>, vector<128x128xbf16>
    %cst_8 = arith.constant dense<0.000000e+00> : vector<8x128xf32>
    %10 = tpu.matmul %8, %9, %cst_8 {dimension_numbers = #tpu.dot_dimension_numbers<[1], [0], [0], [1], [0, 0, 1, 1], [], []>} : vector<8x128xbf16>, vector<128x128xbf16>, vector<8x128xf32> -> vector<8x128xf32>
    %c0_9 = arith.constant 0 : index
    %c0_10 = arith.constant 0 : index
    %11 = vector.load %arg5[%c0_9, %c0_10] : memref<1x128xf32, #tpu.memory_space<vmem>>, vector<1x128xf32>
    %12 = vector.broadcast %11 : vector<1x128xf32> to vector<8x128xf32>
    %13 = arith.addf %10, %12 : vector<8x128xf32>
    %cst_11 = arith.constant 0.000000e+00 : f32
    %14 = vector.broadcast %cst_11 : f32 to vector<8x128xf32>
    %15 = arith.maximumf %13, %14 : vector<8x128xf32>
    %16 = arith.truncf %15 : vector<8x128xf32> to vector<8x128xbf16>
    %c0_12 = arith.constant 0 : index
    %c0_13 = arith.constant 0 : index
    %17 = vector.load %arg6[%c0_12, %c0_13] : memref<128x128xbf16, #tpu.memory_space<vmem>>, vector<128x128xbf16>
    %cst_14 = arith.constant dense<0.000000e+00> : vector<8x128xf32>
    %18 = tpu.matmul %16, %17, %cst_14 {dimension_numbers = #tpu.dot_dimension_numbers<[1], [0], [0], [1], [0, 0, 1, 1], [], []>} : vector<8x128xbf16>, vector<128x128xbf16>, vector<8x128xf32> -> vector<8x128xf32>
    %c0_15 = arith.constant 0 : index
    %c0_16 = arith.constant 0 : index
    %19 = vector.load %arg7[%c0_15, %c0_16] : memref<1x128xf32, #tpu.memory_space<vmem>>, vector<1x128xf32>
    %20 = vector.broadcast %19 : vector<1x128xf32> to vector<8x128xf32>
    %21 = arith.addf %18, %20 : vector<8x128xf32>
    %cst_17 = arith.constant 0.000000e+00 : f32
    %22 = vector.broadcast %cst_17 : f32 to vector<8x128xf32>
    %23 = arith.maximumf %21, %22 : vector<8x128xf32>
    %c0_18 = arith.constant 0 : index
    %c0_19 = arith.constant 0 : index
    %24 = vector.load %arg8[%c0_18, %c0_19] : memref<8x128xf32, #tpu.memory_space<vmem>>, vector<8x128xf32>
    tpu.vector_store %arg8[%c0_18, %c0_19], %23 {strides = array<i32>} : memref<8x128xf32, #tpu.memory_space<vmem>>, vector<8x128xf32>,
    return
  }
  func.func @transform_0(%arg0: i32) -> (i32, i32) {
    %c0_i32 = arith.constant 0 : i32
    %c0_i32_0 = arith.constant 0 : i32
    return %arg0, %c0_i32 : i32, i32
  }
  func.func @transform_1(%arg0: i32) -> (i32, i32) {
    %c0_i32 = arith.constant 0 : i32
    %c0_i32_0 = arith.constant 0 : i32
    %c0_i32_1 = arith.constant 0 : i32
    return %c0_i32, %c0_i32_0 : i32, i32
  }
  func.func @transform_2(%arg0: i32) -> (i32, i32) {
    %c0_i32 = arith.constant 0 : i32
    %c0_i32_0 = arith.constant 0 : i32
    %c0_i32_1 = arith.constant 0 : i32
    return %c0_i32, %c0_i32_0 : i32, i32
  }
  func.func @transform_3(%arg0: i32) -> (i32, i32) {
    %c0_i32 = arith.constant 0 : i32
    %c0_i32_0 = arith.constant 0 : i32
    %c0_i32_1 = arith.constant 0 : i32
    return %c0_i32, %c0_i32_0 : i32, i32
  }
  func.func @transform_4(%arg0: i32) -> (i32, i32) {
    %c0_i32 = arith.constant 0 : i32
    %c0_i32_0 = arith.constant 0 : i32
    %c0_i32_1 = arith.constant 0 : i32
    return %c0_i32, %c0_i32_0 : i32, i32
  }
  func.func @transform_5(%arg0: i32) -> (i32, i32) {
    %c0_i32 = arith.constant 0 : i32
    %c0_i32_0 = arith.constant 0 : i32
    %c0_i32_1 = arith.constant 0 : i32
    return %c0_i32, %c0_i32_0 : i32, i32
  }
  func.func @transform_6(%arg0: i32) -> (i32, i32) {
    %c0_i32 = arith.constant 0 : i32
    %c0_i32_0 = arith.constant 0 : i32
    %c0_i32_1 = arith.constant 0 : i32
    return %c0_i32, %c0_i32_0 : i32, i32
  }
  func.func @transform_7(%arg0: i32) -> (i32, i32) {
    %c0_i32 = arith.constant 0 : i32
    %c0_i32_0 = arith.constant 0 : i32
    return %arg0, %c0_i32 : i32, i32
  }
}

</mosaic_0001>

<llo_original>
// kernel: net_forward.3
$region0: #{net_forward.3}
  #allocation0 [shape = 'u32[]', space=smem, size = 0x4, offset = 0x4, fixed_abs, tag = 'smem constant byte address 0x4 - core index']
  #allocation1 [shape = 'u32[72,128]{1,0:T(1,128)}', space=vmem, size = 0x9000, scoped, tag = 'internal scratch']
  %s0 = inlined_call_operand.vmem [shape: bf16[4,288,128], index: 0, kind: input, shape index: {}]
  %s1 = inlined_call_operand.vmem [shape: bf16[128,128], index: 1, kind: input, shape index: {}]
  %s2 = inlined_call_operand.vmem [shape: f32[1,128], index: 2, kind: input, shape index: {}]
  %s3 = inlined_call_operand.vmem [shape: f32[288,128], index: 3, kind: output, shape index: {}]
  %s4 = sld [smem:[#allocation0]]
  $region53: #{net_forward.3} parent=0
    _
  %s6 = ssub.s32 1, %s4
  %s7 = scalar_select 0, %s6, %s4
  loop: start=0, step=1, limit=6
  $region2: #{net_forward.3} parent=0 // loop_pre_header
    _
  $region3: #{net_forward.3} parent=0 // loop_header
    %s9 = sphi 0, %s13
    %p10 = scmp.ge.s32.totalorder %s9, 6
    %s16 = sphi 0, %s28
    %s17 = sphi 0, %s24
    %s18 = sphi 0, %s16
    %s19 = sphi 0, %s17
    %s20 = sphi 0, %s18
    %s21 = sphi 0, %s19
    %s33 = sphi 0, %s35
    %s36 = sphi 0, %s33
    %s37 = sphi 0, %s36
    %s53 = sphi 0, %s37
    %s57 = sphi 0, %s57
    %s59 = sphi 0, %s57
    %s60 = sphi 0, %s59
    %s74 = sphi 0, %s60
    %s78 = sphi 0, %s78
    %s80 = sphi 0, %s78
    %s81 = sphi 0, %s80
    %s95 = sphi 0, %s81
    %s101 = sphi 0, %s103
    %s104 = sphi 0, %s101
    %s105 = sphi 0, %s104
    %s121 = sphi 0, %s105
  $region4: #{net_forward.3} parent=0 // loop_header_branch
    %12 = sbr.rel (%p10) target = $region8
  $region5: #{net_forward.3} parent=0 // loop_body
    %s14 = ssub.s32 %s9, 1
    %s15 = ssub.s32 %s9, 2
    %s22 = sadd.s32 1, %s17
    %p23 = scmp.ge.s32.totalorder %s22, 4
    %s24 = scalar_select %p23, 0, %s22
    %s25 = sadd.s32 1, %s16
    %s26 = scalar_select %p23, %s25, %s16
    %p27 = scmp.ge.s32.totalorder %s26, 1
    %s28 = scalar_select %p27, 0, %s26
    %s29 = ssub.s32 %s17, %s24
    %s30 = ssub.s32 %s16, %s28
    %s31 = sor.u32 %s29, %s30
    %p32 = scmp.eq.s32.totalorder %s31, 0
    %s34 = sadd.s32 %s33, 1
    %s35 = scalar_select %p32, %s33, %s34
    %p38 = pneg %p32
    %p39 = scmp.eq.s32.totalorder %s9, 3
    %p40 = por %p38, %p39
    %p41 = scmp.ne.s32.totalorder %s33, %s36
    %p42 = scmp.eq.s32.totalorder %s9, 0
    %p43 = por %p41, %p42
    %p44 = scmp.ne.s32.totalorder %s33, %s36
    %p45 = scmp.eq.s32.totalorder %s14, 3
    %p46 = por %p44, %p45
    %p47 = scmp.ne.s32.totalorder %s36, %s37
    %p48 = scmp.eq.s32.totalorder %s14, 0
    %p49 = por %p47, %p48
    %p50 = scmp.ne.s32.totalorder %s36, %s37
    %p51 = scmp.eq.s32.totalorder %s15, 3
    %p52 = por %p50, %p51
    %p54 = scmp.ne.s32.totalorder %s37, %s53
    %p55 = scmp.eq.s32.totalorder %s15, 0
    %p56 = por %p54, %p55
    %s58 = sadd.s32 %s57, 1
    %p61 = scmp.eq.s32.totalorder %s9, 3
    %p62 = scmp.ne.s32.totalorder %s57, %s59
    %p63 = scmp.eq.s32.totalorder %s9, 0
    %p64 = por %p62, %p63
    %p65 = scmp.ne.s32.totalorder %s57, %s59
    %p66 = scmp.eq.s32.totalorder %s14, 3
    %p67 = por %p65, %p66
    %p68 = scmp.ne.s32.totalorder %s59, %s60
    %p69 = scmp.eq.s32.totalorder %s14, 0
    %p70 = por %p68, %p69
    %p71 = scmp.ne.s32.totalorder %s59, %s60
    %p72 = scmp.eq.s32.totalorder %s15, 3
    %p73 = por %p71, %p72
    %p75 = scmp.ne.s32.totalorder %s60, %s74
    %p76 = scmp.eq.s32.totalorder %s15, 0
    %p77 = por %p75, %p76
    %s79 = sadd.s32 %s78, 1
    %p82 = scmp.eq.s32.totalorder %s9, 3
    %p83 = scmp.ne.s32.totalorder %s78, %s80
    %p84 = scmp.eq.s32.totalorder %s9, 0
    %p85 = por %p83, %p84
    %p86 = scmp.ne.s32.totalorder %s78, %s80
    %p87 = scmp.eq.s32.totalorder %s14, 3
    %p88 = por %p86, %p87
    %p89 = scmp.ne.s32.totalorder %s80, %s81
    %p90 = scmp.eq.s32.totalorder %s14, 0
    %p91 = por %p89, %p90
    %p92 = scmp.ne.s32.totalorder %s80, %s81
    %p93 = scmp.eq.s32.totalorder %s15, 3
    %p94 = por %p92, %p93
    %p96 = scmp.ne.s32.totalorder %s81, %s95
    %p97 = scmp.eq.s32.totalorder %s15, 0
    %p98 = por %p96, %p97
    %s99 = ssub.s32 %s16, %s28
    %p100 = scmp.eq.s32.totalorder %s99, 0
    %s102 = sadd.s32 %s101, 1
    %s103 = scalar_select %p100, %s101, %s102
    %p106 = pneg %p100
    %p107 = scmp.eq.s32.totalorder %s9, 3
    %p108 = por %p106, %p107
    %p109 = scmp.ne.s32.totalorder %s101, %s104
    %p110 = scmp.eq.s32.totalorder %s9, 0
    %p111 = por %p109, %p110
    %p112 = scmp.ne.s32.totalorder %s101, %s104
    %p113 = scmp.eq.s32.totalorder %s14, 3
    %p114 = por %p112, %p113
    %p115 = scmp.ne.s32.totalorder %s104, %s105
    %p116 = scmp.eq.s32.totalorder %s14, 0
    %p117 = por %p115, %p116
    %p118 = scmp.ne.s32.totalorder %s104, %s105
    %p119 = scmp.eq.s32.totalorder %s15, 3
    %p120 = por %p118, %p119
    %p122 = scmp.ne.s32.totalorder %s105, %s121
    %p123 = scmp.eq.s32.totalorder %s15, 0
    %p124 = por %p122, %p123
    %p125 = scmp.le.s32.totalorder 1, %s9
    %p126 = scmp.lt.s32.totalorder %s9, 5
    %p127 = pnand %p125, %p126
    %p128 = pneg %p127
    // Predicated region
    $region9: #{net_forward.3} parent=5 // pred_check
      _
    $region10: #{net_forward.3} parent=5 // pred_check_branch
      %130 = sbr.rel (%p127) target = $region12
    $region11: #{net_forward.3} parent=5 // pred_region
      %s131 = ssub.s32 %s9, 1
      // Predicated region
      $region13: #{net_forward.3} parent=11 // pred_check
        %p132 = pneg %p70
      $region14: #{net_forward.3} parent=11 // pred_check_branch
        %134 = sbr.rel (%p132) target = $region16
      $region15: #{net_forward.3} parent=11 // pred_region
        _
      $region16: #{net_forward.3} parent=11 // pred_fallthru
        _
      // Predicated region
      $region17: #{net_forward.3} parent=11 // pred_check
        %p135 = pneg %p91
      $region18: #{net_forward.3} parent=11 // pred_check_branch
        %137 = sbr.rel (%p135) target = $region20
      $region19: #{net_forward.3} parent=11 // pred_region
        _
      $region20: #{net_forward.3} parent=11 // pred_fallthru
        _
    $region12: #{net_forward.3} parent=5 // pred_fallthru
      _
    %p138 = scmp.lt.s32.totalorder %s9, 4
    // Predicated region
    $region21: #{net_forward.3} parent=5 // pred_check
      %p139 = pneg %p138
    $region22: #{net_forward.3} parent=5 // pred_check_branch
      %141 = sbr.rel (%p139) target = $region24
    $region23: #{net_forward.3} parent=5 // pred_region
      // Predicated region
      $region25: #{net_forward.3} parent=23 // pred_check
        %p142 = pneg %p43
      $region26: #{net_forward.3} parent=23 // pred_check_branch
        %144 = sbr.rel (%p142) target = $region28
      $region27: #{net_forward.3} parent=23 // pred_region
        %s145 = smul.u32 36, %s16
        %p146 = scmp.lt.s32.totalorder %s17, 3
        %s147 = scalar_select %p146, %s17, 3
        %p148 = scmp.lt.s32.totalorder %s145, 35
        %s149 = scalar_select %p148, %s145, 35
        %s150 = smul.addr %s147, 36
        %s151 = sadd.s32 %s149, %s150
        %s152 = smul.addr %s151, 4
        %s153 = scalar_lea.vmem %s0, %s152
        %s154 = smul.u32 36, %s16
      $region28: #{net_forward.3} parent=23 // pred_fallthru
        _
    $region24: #{net_forward.3} parent=5 // pred_fallthru
      _
    %p155 = scmp.le.s32.totalorder 1, %s9
    %p156 = scmp.lt.s32.totalorder %s9, 5
    %p157 = pnand %p155, %p156
    %p158 = pneg %p157
    // Predicated region
    $region29: #{net_forward.3} parent=5 // pred_check
      _
    $region30: #{net_forward.3} parent=5 // pred_check_branch
      %160 = sbr.rel (%p157) target = $region32
    $region31: #{net_forward.3} parent=5 // pred_region
      %s161 = ssub.s32 %s9, 1
      %s162 = smul.u32 36, %s18
      %p163 = scmp.lt.s32.totalorder %s19, 3
      %s164 = scalar_select %p163, %s19, 3
      %p165 = scmp.lt.s32.totalorder %s162, 35
      %s166 = scalar_select %p165, %s162, 35
      %s167 = smul.addr %s164, 36
      %s168 = sadd.s32 %s166, %s167
      %s169 = smul.addr %s168, 4
      %s170 = scalar_lea.vmem %s0, %s169
      %p171 = pneg %p49
      %p172 = pneg %p46
      %p173 = pneg %p70
      %p174 = pneg %p67
      %p175 = pneg %p91
      %p176 = pneg %p88
      %p177 = pneg %p117
      %p178 = pneg %p114
      %s179 = smul.u32 36, %s18
      %p180 = scmp.lt.s32.totalorder %s179, 35
      %s181 = scalar_select %p180, %s179, 35
      %s182 = smul.addr %s181, 8
      %s183 = scalar_lea.vmem %s3, %s182
      %s184 = smul.u32 36, %s18
      %p185 = scmp.lt.s32.totalorder %s19, 3
      %s186 = scalar_select %p185, %s19, 3
      %p187 = scmp.lt.s32.totalorder %s184, 35
      %s188 = scalar_select %p187, %s184, 35
      %s189 = smul.addr %s186, 36
      %s190 = sadd.s32 %s188, %s189
      %s191 = smul.addr %s190, 4
      %s192 = scalar_lea.vmem %s0, %s191
      %s193 = smul.u32 36, %s18
      %s194 = smul.u32 36, %s18
      %p195 = scmp.lt.s32.totalorder %s194, 35
      %s196 = scalar_select %p195, %s194, 35
      %s197 = smul.addr %s196, 8
      %s198 = scalar_lea.vmem %s3, %s197
      %s199 = smul.u32 36, %s18
      %v200 = vld [vmem:[%s192] sm:$0xf]
      %v201 = vld [vmem:[%s192 + $0x4] sm:$0xf]
      %v202 = vld [vmem:[%s192 + $0x8] sm:$0xf]
      %v203 = vld [vmem:[%s192 + $0xc] sm:$0xf]
      %v204 = vld [vmem:[%s192 + $0x10] sm:$0xf]
      %v205 = vld [vmem:[%s192 + $0x14] sm:$0xf]
      %v206 = vld [vmem:[%s192 + $0x18] sm:$0xf]
      %v207 = vld [vmem:[%s192 + $0x1c] sm:$0xf]
      %v208 = vld [vmem:[%s192 + $0x20] sm:$0xf]
      %v209 = vld [vmem:[%s192 + $0x24] sm:$0xf]
      %v210 = vld [vmem:[%s192 + $0x28] sm:$0xf]
      %v211 = vld [vmem:[%s192 + $0x2c] sm:$0xf]
      %v212 = vld [vmem:[%s192 + $0x30] sm:$0xf]
      %v213 = vld [vmem:[%s192 + $0x34] sm:$0xf]
      %v214 = vld [vmem:[%s192 + $0x38] sm:$0xf]
      %v215 = vld [vmem:[%s192 + $0x3c] sm:$0xf]
      %v216 = vld [vmem:[%s192 + $0x40] sm:$0xf]
      %v217 = vld [vmem:[%s192 + $0x44] sm:$0xf]
      %v218 = vld [vmem:[%s192 + $0x48] sm:$0xf]
      %v219 = vld [vmem:[%s192 + $0x4c] sm:$0xf]
      %v220 = vld [vmem:[%s192 + $0x50] sm:$0xf]
      %v221 = vld [vmem:[%s192 + $0x54] sm:$0xf]
      %v222 = vld [vmem:[%s192 + $0x58] sm:$0xf]
      %v223 = vld [vmem:[%s192 + $0x5c] sm:$0xf]
      %v224 = vld [vmem:[%s192 + $0x60] sm:$0xf]
      %v225 = vld [vmem:[%s192 + $0x64] sm:$0xf]
      %v226 = vld [vmem:[%s192 + $0x68] sm:$0xf]
      %v227 = vld [vmem:[%s192 + $0x6c] sm:$0xf]
      %v228 = vld [vmem:[%s192 + $0x70] sm:$0xf]
      %v229 = vld [vmem:[%s192 + $0x74] sm:$0xf]
      %v230 = vld [vmem:[%s192 + $0x78] sm:$0xf]
      %v231 = vld [vmem:[%s192 + $0x7c] sm:$0xf]
      %v232 = vld [vmem:[%s192 + $0x80] sm:$0xf]
      %v233 = vld [vmem:[%s192 + $0x84] sm:$0xf]
      %v234 = vld [vmem:[%s192 + $0x88] sm:$0xf]
      %v235 = vld [vmem:[%s192 + $0x8c] sm:$0xf]
      %v236 = vld [vmem:[%s1] sm:$0xf]
      %v237 = vld [vmem:[%s1 + $0x4] sm:$0xf]
      %v238 = vld [vmem:[%s1 + $0x8] sm:$0xf]
      %v239 = vld [vmem:[%s1 + $0xc] sm:$0xf]
      %v240 = vld [vmem:[%s1 + $0x10] sm:$0xf]
      %v241 = vld [vmem:[%s1 + $0x14] sm:$0xf]
      %v242 = vld [vmem:[%s1 + $0x18] sm:$0xf]
      %v243 = vld [vmem:[%s1 + $0x1c] sm:$0xf]
      %v244 = vld [vmem:[%s1 + $0x20] sm:$0xf]
      %v245 = vld [vmem:[%s1 + $0x24] sm:$0xf]
      %v246 = vld [vmem:[%s1 + $0x28] sm:$0xf]
      %v247 = vld [vmem:[%s1 + $0x2c] sm:$0xf]
      %v248 = vld [vmem:[%s1 + $0x30] sm:$0xf]
      %v249 = vld [vmem:[%s1 + $0x34] sm:$0xf]
      %v250 = vld [vmem:[%s1 + $0x38] sm:$0xf]
      %v251 = vld [vmem:[%s1 + $0x3c] sm:$0xf]
      %v252 = vld [vmem:[%s2] sm:$0x1]
      %v254 = vperm.slane %v252, 0
      %v292 = vunpack.c.l.b16 %v200
      %v293 = vunpack.c.l.b16 %v201
      %v294 = vunpack.c.l.b16 %v202
      %v295 = vunpack.c.l.b16 %v203
      %v296 = vunpack.c.l.b16 %v204
      %v297 = vunpack.c.l.b16 %v205
      %v298 = vunpack.c.l.b16 %v206
      %v299 = vunpack.c.l.b16 %v207
      %v300 = vunpack.c.l.b16 %v208
      %v301 = vunpack.c.l.b16 %v209
      %v302 = vunpack.c.l.b16 %v210
      %v303 = vunpack.c.l.b16 %v211
      %v304 = vunpack.c.l.b16 %v212
      %v305 = vunpack.c.l.b16 %v213
      %v306 = vunpack.c.l.b16 %v214
      %v307 = vunpack.c.l.b16 %v215
      %v308 = vunpack.c.l.b16 %v216
      %v309 = vunpack.c.l.b16 %v217
      %v310 = vunpack.c.l.b16 %v218
      %v311 = vunpack.c.l.b16 %v219
      %v312 = vunpack.c.l.b16 %v220
      %v313 = vunpack.c.l.b16 %v221
      %v314 = vunpack.c.l.b16 %v222
      %v315 = vunpack.c.l.b16 %v223
      %v316 = vunpack.c.l.b16 %v224
      %v317 = vunpack.c.l.b16 %v225
      %v318 = vunpack.c.l.b16 %v226
      %v319 = vunpack.c.l.b16 %v227
      %v320 = vunpack.c.l.b16 %v228
      %v321 = vunpack.c.l.b16 %v229
      %v322 = vunpack.c.l.b16 %v230
      %v323 = vunpack.c.l.b16 %v231
      %v324 = vunpack.c.l.b16 %v232
      %v325 = vunpack.c.l.b16 %v233
      %v326 = vunpack.c.l.b16 %v234
      %v327 = vunpack.c.l.b16 %v235
      %v328 = vpack.c.b16 %v293, %v292
      %v329 = vpack.c.b16 %v295, %v294
      %v330 = vpack.c.b16 %v297, %v296
      %v331 = vpack.c.b16 %v299, %v298
      %v332 = vpack.c.b16 %v301, %v300
      %v333 = vpack.c.b16 %v303, %v302
      %v334 = vpack.c.b16 %v305, %v304
      %v335 = vpack.c.b16 %v307, %v306
      %v336 = vpack.c.b16 %v309, %v308
      %v337 = vpack.c.b16 %v311, %v310
      %v338 = vpack.c.b16 %v313, %v312
      %v339 = vpack.c.b16 %v315, %v314
      %v340 = vpack.c.b16 %v317, %v316
      %v341 = vpack.c.b16 %v319, %v318
      %v342 = vpack.c.b16 %v321, %v320
      %v343 = vpack.c.b16 %v323, %v322
      %v344 = vpack.c.b16 %v325, %v324
      %v345 = vpack.c.b16 %v327, %v326
      %v380 = vunpack.c.l.b16 %v236
      %v381 = vunpack.c.l.b16 %v237
      %v382 = vunpack.c.l.b16 %v238
      %v383 = vunpack.c.l.b16 %v239
      %v384 = vunpack.c.l.b16 %v240
      %v385 = vunpack.c.l.b16 %v241
      %v386 = vunpack.c.l.b16 %v242
      %v387 = vunpack.c.l.b16 %v243
      %v388 = vunpack.c.l.b16 %v244
      %v389 = vunpack.c.l.b16 %v245
      %v390 = vunpack.c.l.b16 %v246
      %v391 = vunpack.c.l.b16 %v247
      %v392 = vunpack.c.l.b16 %v248
      %v393 = vunpack.c.l.b16 %v249
      %v394 = vunpack.c.l.b16 %v250
      %v395 = vunpack.c.l.b16 %v251
      %v396 = vpack.c.b16 %v381, %v380
      %v397 = vpack.c.b16 %v383, %v382
      %v398 = vpack.c.b16 %v385, %v384
      %v399 = vpack.c.b16 %v387, %v386
      %v400 = vpack.c.b16 %v389, %v388
      %v401 = vpack.c.b16 %v391, %v390
      %v402 = vpack.c.b16 %v393, %v392
      %v403 = vpack.c.b16 %v395, %v394
      %412 = vmatpush.bf16.msra.mxu0 %v403
      %413 = vmatpush.bf16.msra.mxu0 %v402
      %414 = vmatpush.bf16.msra.mxu0 %v401
      %415 = vmatpush.bf16.msra.mxu0 %v400
      %416 = vmatpush.bf16.msra.mxu0 %v399
      %417 = vmatpush.bf16.msra.mxu0 %v398
      %418 = vmatpush.bf16.msra.mxu0 %v397
      %419 = vmatpush.bf16.msra.mxu0 %v396
      %420 = vmatmul.bf16.gmra.mxu0 %v328
      %v421 = vpop.f32.mrf.mxu0
      %v422 = vadd.f32 %v254, %v421
      %v423 = vpop.f32.mrf.mxu0
      %v424 = vadd.f32 %v254, %v423
      %425 = vmatmul.bf16.gmra.mxu0 %v329
      %v426 = vpop.f32.mrf.mxu0
      %v427 = vadd.f32 %v254, %v426
      %v428 = vpop.f32.mrf.mxu0
      %v429 = vadd.f32 %v254, %v428
      %430 = vmatmul.bf16.gmra.mxu0 %v330
      %v431 = vpop.f32.mrf.mxu0
      %v432 = vadd.f32 %v254, %v431
      %v433 = vpop.f32.mrf.mxu0
      %v434 = vadd.f32 %v254, %v433
      %435 = vmatmul.bf16.gmra.mxu0 %v331
      %v436 = vpop.f32.mrf.mxu0
      %v437 = vadd.f32 %v254, %v436
      %v438 = vpop.f32.mrf.mxu0
      %v439 = vadd.f32 %v254, %v438
      %440 = vmatmul.bf16.gmra.mxu0 %v332
      %v441 = vpop.f32.mrf.mxu0
      %v442 = vadd.f32 %v254, %v441
      %v443 = vpop.f32.mrf.mxu0
      %v444 = vadd.f32 %v254, %v443
      %445 = vmatmul.bf16.gmra.mxu0 %v333
      %v446 = vpop.f32.mrf.mxu0
      %v447 = vadd.f32 %v254, %v446
      %v448 = vpop.f32.mrf.mxu0
      %v449 = vadd.f32 %v254, %v448
      %450 = vmatmul.bf16.gmra.mxu0 %v334
      %v451 = vpop.f32.mrf.mxu0
      %v452 = vadd.f32 %v254, %v451
      %v453 = vpop.f32.mrf.mxu0
      %v454 = vadd.f32 %v254, %v453
      %455 = vmatmul.bf16.gmra.mxu0 %v335
      %v456 = vpop.f32.mrf.mxu0
      %v457 = vadd.f32 %v254, %v456
      %v458 = vpop.f32.mrf.mxu0
      %v459 = vadd.f32 %v254, %v458
      %460 = vmatmul.bf16.gmra.mxu0 %v336
      %v461 = vpop.f32.mrf.mxu0
      %v462 = vadd.f32 %v254, %v461
      %v463 = vpop.f32.mrf.mxu0
      %v464 = vadd.f32 %v254, %v463
      %465 = vmatmul.bf16.gmra.mxu0 %v337
      %v466 = vpop.f32.mrf.mxu0
      %v467 = vadd.f32 %v254, %v466
      %v468 = vpop.f32.mrf.mxu0
      %v469 = vadd.f32 %v254, %v468
      %470 = vmatmul.bf16.gmra.mxu0 %v338
      %v471 = vpop.f32.mrf.mxu0
      %v472 = vadd.f32 %v254, %v471
      %v473 = vpop.f32.mrf.mxu0
      %v474 = vadd.f32 %v254, %v473
      %475 = vmatmul.bf16.gmra.mxu0 %v339
      %v476 = vpop.f32.mrf.mxu0
      %v477 = vadd.f32 %v254, %v476
      %v478 = vpop.f32.mrf.mxu0
      %v479 = vadd.f32 %v254, %v478
      %480 = vmatmul.bf16.gmra.mxu0 %v340
      %v481 = vpop.f32.mrf.mxu0
      %v482 = vadd.f32 %v254, %v481
      %v483 = vpop.f32.mrf.mxu0
      %v484 = vadd.f32 %v254, %v483
      %485 = vmatmul.bf16.gmra.mxu0 %v341
      %v486 = vpop.f32.mrf.mxu0
      %v487 = vadd.f32 %v254, %v486
      %v488 = vpop.f32.mrf.mxu0
      %v489 = vadd.f32 %v254, %v488
      %490 = vmatmul.bf16.gmra.mxu0 %v342
      %v491 = vpop.f32.mrf.mxu0
      %v492 = vadd.f32 %v254, %v491
      %v493 = vpop.f32.mrf.mxu0
      %v494 = vadd.f32 %v254, %v493
      %495 = vmatmul.bf16.gmra.mxu0 %v343
      %v496 = vpop.f32.mrf.mxu0
      %v497 = vadd.f32 %v254, %v496
      %v498 = vpop.f32.mrf.mxu0
      %v499 = vadd.f32 %v254, %v498
      %500 = vmatmul.bf16.gmra.mxu0 %v344
      %v501 = vpop.f32.mrf.mxu0
      %v502 = vadd.f32 %v254, %v501
      %v503 = vpop.f32.mrf.mxu0
      %v504 = vadd.f32 %v254, %v503
      %505 = vmatmul.bf16.gmra.mxu0 %v345
      %v506 = vpop.f32.mrf.mxu0
      %v507 = vadd.f32 %v254, %v506
      %v508 = vpop.f32.mrf.mxu0
      %v509 = vadd.f32 %v254, %v508
      %510 = vdwg.mxu0
      %v511 = vmax.f32 %v422, 0.0
      %v512 = vmax.f32 %v424, 0.0
      %v513 = vmax.f32 %v427, 0.0
      %v514 = vmax.f32 %v429, 0.0
      %v515 = vmax.f32 %v432, 0.0
      %v516 = vmax.f32 %v434, 0.0
      %v517 = vmax.f32 %v437, 0.0
      %v518 = vmax.f32 %v439, 0.0
      %v519 = vmax.f32 %v442, 0.0
      %v520 = vmax.f32 %v444, 0.0
      %v521 = vmax.f32 %v447, 0.0
      %v522 = vmax.f32 %v449, 0.0
      %v523 = vmax.f32 %v452, 0.0
      %v524 = vmax.f32 %v454, 0.0
      %v525 = vmax.f32 %v457, 0.0
      %v526 = vmax.f32 %v459, 0.0
      %v527 = vmax.f32 %v462, 0.0
      %v528 = vmax.f32 %v464, 0.0
      %v529 = vmax.f32 %v467, 0.0
      %v530 = vmax.f32 %v469, 0.0
      %v531 = vmax.f32 %v472, 0.0
      %v532 = vmax.f32 %v474, 0.0
      %v533 = vmax.f32 %v477, 0.0
      %v534 = vmax.f32 %v479, 0.0
      %v535 = vmax.f32 %v482, 0.0
      %v536 = vmax.f32 %v484, 0.0
      %v537 = vmax.f32 %v487, 0.0
      %v538 = vmax.f32 %v489, 0.0
      %v539 = vmax.f32 %v492, 0.0
      %v540 = vmax.f32 %v494, 0.0
      %v541 = vmax.f32 %v497, 0.0
      %v542 = vmax.f32 %v499, 0.0
      %v543 = vmax.f32 %v502, 0.0
      %v544 = vmax.f32 %v504, 0.0
      %v545 = vmax.f32 %v507, 0.0
      %v546 = vmax.f32 %v509, 0.0
      %p547 = scmp.eq.s32.totalorder %s19, 0
      // Predicated region
      $region33: #{net_forward.3} parent=31 // pred_check
        %p548 = pneg %p547
      $region34: #{net_forward.3} parent=31 // pred_check_branch
        %550 = sbr.rel (%p548) target = $region36
      $region35: #{net_forward.3} parent=31 // pred_region
        %551 = vst [vmem:[%s198] sm:$0xff] %v511
        %552 = vst [vmem:[%s198 + $0x8] sm:$0xff] %v512
        %553 = vst [vmem:[%s198 + $0x10] sm:$0xff] %v513
        %554 = vst [vmem:[%s198 + $0x18] sm:$0xff] %v514
        %555 = vst [vmem:[%s198 + $0x20] sm:$0xff] %v515
        %556 = vst [vmem:[%s198 + $0x28] sm:$0xff] %v516
        %557 = vst [vmem:[%s198 + $0x30] sm:$0xff] %v517
        %558 = vst [vmem:[%s198 + $0x38] sm:$0xff] %v518
        %559 = vst [vmem:[%s198 + $0x40] sm:$0xff] %v519
        %560 = vst [vmem:[%s198 + $0x48] sm:$0xff] %v520
        %561 = vst [vmem:[%s198 + $0x50] sm:$0xff] %v521
        %562 = vst [vmem:[%s198 + $0x58] sm:$0xff] %v522
        %563 = vst [vmem:[%s198 + $0x60] sm:$0xff] %v523
        %564 = vst [vmem:[%s198 + $0x68] sm:$0xff] %v524
        %565 = vst [vmem:[%s198 + $0x70] sm:$0xff] %v525
        %566 = vst [vmem:[%s198 + $0x78] sm:$0xff] %v526
        %567 = vst [vmem:[%s198 + $0x80] sm:$0xff] %v527
        %568 = vst [vmem:[%s198 + $0x88] sm:$0xff] %v528
        %569 = vst [vmem:[%s198 + $0x90] sm:$0xff] %v529
        %570 = vst [vmem:[%s198 + $0x98] sm:$0xff] %v530
        %571 = vst [vmem:[%s198 + $0xa0] sm:$0xff] %v531
        %572 = vst [vmem:[%s198 + $0xa8] sm:$0xff] %v532
        %573 = vst [vmem:[%s198 + $0xb0] sm:$0xff] %v533
        %574 = vst [vmem:[%s198 + $0xb8] sm:$0xff] %v534
        %575 = vst [vmem:[%s198 + $0xc0] sm:$0xff] %v535
        %576 = vst [vmem:[%s198 + $0xc8] sm:$0xff] %v536
        %577 = vst [vmem:[%s198 + $0xd0] sm:$0xff] %v537
        %578 = vst [vmem:[%s198 + $0xd8] sm:$0xff] %v538
        %579 = vst [vmem:[%s198 + $0xe0] sm:$0xff] %v539
        %580 = vst [vmem:[%s198 + $0xe8] sm:$0xff] %v540
        %581 = vst [vmem:[%s198 + $0xf0] sm:$0xff] %v541
        %582 = vst [vmem:[%s198 + $0xf8] sm:$0xff] %v542
        %583 = vst [vmem:[%s198 + $0x100] sm:$0xff] %v543
        %584 = vst [vmem:[%s198 + $0x108] sm:$0xff] %v544
        %585 = vst [vmem:[%s198 + $0x110] sm:$0xff] %v545
        %586 = vst [vmem:[%s198 + $0x118] sm:$0xff] %v546
      $region36: #{net_forward.3} parent=31 // pred_fallthru
        _
      %p587 = scmp.gt.s32.totalorder %s19, 0
      // Predicated region
      $region37: #{net_forward.3} parent=31 // pred_check
        %p588 = pneg %p587
      $region38: #{net_forward.3} parent=31 // pred_check_branch
        %590 = sbr.rel (%p588) target = $region40
      $region39: #{net_forward.3} parent=31 // pred_region
        %v591 = vld [vmem:[%s198] sm:$0xff]
        %v592 = vld [vmem:[%s198 + $0x8] sm:$0xff]
        %v593 = vld [vmem:[%s198 + $0x10] sm:$0xff]
        %v594 = vld [vmem:[%s198 + $0x18] sm:$0xff]
        %v595 = vld [vmem:[%s198 + $0x20] sm:$0xff]
        %v596 = vld [vmem:[%s198 + $0x28] sm:$0xff]
        %v597 = vld [vmem:[%s198 + $0x30] sm:$0xff]
        %v598 = vld [vmem:[%s198 + $0x38] sm:$0xff]
        %v599 = vld [vmem:[%s198 + $0x40] sm:$0xff]
        %v600 = vld [vmem:[%s198 + $0x48] sm:$0xff]
        %v601 = vld [vmem:[%s198 + $0x50] sm:$0xff]
        %v602 = vld [vmem:[%s198 + $0x58] sm:$0xff]
        %v603 = vld [vmem:[%s198 + $0x60] sm:$0xff]
        %v604 = vld [vmem:[%s198 + $0x68] sm:$0xff]
        %v605 = vld [vmem:[%s198 + $0x70] sm:$0xff]
        %v606 = vld [vmem:[%s198 + $0x78] sm:$0xff]
        %v607 = vld [vmem:[%s198 + $0x80] sm:$0xff]
        %v608 = vld [vmem:[%s198 + $0x88] sm:$0xff]
        %v609 = vld [vmem:[%s198 + $0x90] sm:$0xff]
        %v610 = vld [vmem:[%s198 + $0x98] sm:$0xff]
        %v611 = vld [vmem:[%s198 + $0xa0] sm:$0xff]
        %v612 = vld [vmem:[%s198 + $0xa8] sm:$0xff]
        %v613 = vld [vmem:[%s198 + $0xb0] sm:$0xff]
        %v614 = vld [vmem:[%s198 + $0xb8] sm:$0xff]
        %v615 = vld [vmem:[%s198 + $0xc0] sm:$0xff]
        %v616 = vld [vmem:[%s198 + $0xc8] sm:$0xff]
        %v617 = vld [vmem:[%s198 + $0xd0] sm:$0xff]
        %v618 = vld [vmem:[%s198 + $0xd8] sm:$0xff]
        %v619 = vld [vmem:[%s198 + $0xe0] sm:$0xff]
        %v620 = vld [vmem:[%s198 + $0xe8] sm:$0xff]
        %v621 = vld [vmem:[%s198 + $0xf0] sm:$0xff]
        %v622 = vld [vmem:[%s198 + $0xf8] sm:$0xff]
        %v623 = vld [vmem:[%s198 + $0x100] sm:$0xff]
        %v624 = vld [vmem:[%s198 + $0x108] sm:$0xff]
        %v625 = vld [vmem:[%s198 + $0x110] sm:$0xff]
        %v626 = vld [vmem:[%s198 + $0x118] sm:$0xff]
        %v627 = vmax.f32 %v591, %v511
        %v628 = vmax.f32 %v592, %v512
        %v629 = vmax.f32 %v593, %v513
        %v630 = vmax.f32 %v594, %v514
        %v631 = vmax.f32 %v595, %v515
        %v632 = vmax.f32 %v596, %v516
        %v633 = vmax.f32 %v597, %v517
        %v634 = vmax.f32 %v598, %v518
        %v635 = vmax.f32 %v599, %v519
        %v636 = vmax.f32 %v600, %v520
        %v637 = vmax.f32 %v601, %v521
        %v638 = vmax.f32 %v602, %v522
        %v639 = vmax.f32 %v603, %v523
        %v640 = vmax.f32 %v604, %v524
        %v641 = vmax.f32 %v605, %v525
        %v642 = vmax.f32 %v606, %v526
        %v643 = vmax.f32 %v607, %v527
        %v644 = vmax.f32 %v608, %v528
        %v645 = vmax.f32 %v609, %v529
        %v646 = vmax.f32 %v610, %v530
        %v647 = vmax.f32 %v611, %v531
        %v648 = vmax.f32 %v612, %v532
        %v649 = vmax.f32 %v613, %v533
        %v650 = vmax.f32 %v614, %v534
        %v651 = vmax.f32 %v615, %v535
        %v652 = vmax.f32 %v616, %v536
        %v653 = vmax.f32 %v617, %v537
        %v654 = vmax.f32 %v618, %v538
        %v655 = vmax.f32 %v619, %v539
        %v656 = vmax.f32 %v620, %v540
        %v657 = vmax.f32 %v621, %v541
        %v658 = vmax.f32 %v622, %v542
        %v659 = vmax.f32 %v623, %v543
        %v660 = vmax.f32 %v624, %v544
        %v661 = vmax.f32 %v625, %v545
        %v662 = vmax.f32 %v626, %v546
        %663 = vst [vmem:[%s198] sm:$0xff] %v627
        %664 = vst [vmem:[%s198 + $0x8] sm:$0xff] %v628
        %665 = vst [vmem:[%s198 + $0x10] sm:$0xff] %v629
        %666 = vst [vmem:[%s198 + $0x18] sm:$0xff] %v630
        %667 = vst [vmem:[%s198 + $0x20] sm:$0xff] %v631
        %668 = vst [vmem:[%s198 + $0x28] sm:$0xff] %v632
        %669 = vst [vmem:[%s198 + $0x30] sm:$0xff] %v633
        %670 = vst [vmem:[%s198 + $0x38] sm:$0xff] %v634
        %671 = vst [vmem:[%s198 + $0x40] sm:$0xff] %v635
        %672 = vst [vmem:[%s198 + $0x48] sm:$0xff] %v636
        %673 = vst [vmem:[%s198 + $0x50] sm:$0xff] %v637
        %674 = vst [vmem:[%s198 + $0x58] sm:$0xff] %v638
        %675 = vst [vmem:[%s198 + $0x60] sm:$0xff] %v639
        %676 = vst [vmem:[%s198 + $0x68] sm:$0xff] %v640
        %677 = vst [vmem:[%s198 + $0x70] sm:$0xff] %v641
        %678 = vst [vmem:[%s198 + $0x78] sm:$0xff] %v642
        %679 = vst [vmem:[%s198 + $0x80] sm:$0xff] %v643
        %680 = vst [vmem:[%s198 + $0x88] sm:$0xff] %v644
        %681 = vst [vmem:[%s198 + $0x90] sm:$0xff] %v645
        %682 = vst [vmem:[%s198 + $0x98] sm:$0xff] %v646
        %683 = vst [vmem:[%s198 + $0xa0] sm:$0xff] %v647
        %684 = vst [vmem:[%s198 + $0xa8] sm:$0xff] %v648
        %685 = vst [vmem:[%s198 + $0xb0] sm:$0xff] %v649
        %686 = vst [vmem:[%s198 + $0xb8] sm:$0xff] %v650
        %687 = vst [vmem:[%s198 + $0xc0] sm:$0xff] %v651
        %688 = vst [vmem:[%s198 + $0xc8] sm:$0xff] %v652
        %689 = vst [vmem:[%s198 + $0xd0] sm:$0xff] %v653
        %690 = vst [vmem:[%s198 + $0xd8] sm:$0xff] %v654
        %691 = vst [vmem:[%s198 + $0xe0] sm:$0xff] %v655
        %692 = vst [vmem:[%s198 + $0xe8] sm:$0xff] %v656
        %693 = vst [vmem:[%s198 + $0xf0] sm:$0xff] %v657
        %694 = vst [vmem:[%s198 + $0xf8] sm:$0xff] %v658
        %695 = vst [vmem:[%s198 + $0x100] sm:$0xff] %v659
        %696 = vst [vmem:[%s198 + $0x108] sm:$0xff] %v660
        %697 = vst [vmem:[%s198 + $0x110] sm:$0xff] %v661
        %698 = vst [vmem:[%s198 + $0x118] sm:$0xff] %v662
      $region40: #{net_forward.3} parent=31 // pred_fallthru
        _
      %s699 = smul.u32 36, %s18
      %p700 = scmp.lt.s32.totalorder %s699, 35
      %s701 = scalar_select %p700, %s699, 35
      %s702 = smul.addr %s701, 8
      %s703 = scalar_lea.vmem %s3, %s702
      // Predicated region
      $region41: #{net_forward.3} parent=31 // pred_check
        %p704 = pneg %p114
      $region42: #{net_forward.3} parent=31 // pred_check_branch
        %706 = sbr.rel (%p704) target = $region44
      $region43: #{net_forward.3} parent=31 // pred_region
        %s707 = smul.u32 36, %s18
      $region44: #{net_forward.3} parent=31 // pred_fallthru
        _
      // Predicated region
      $region45: #{net_forward.3} parent=31 // pred_check
        %p708 = pneg %p114
      $region46: #{net_forward.3} parent=31 // pred_check_branch
        %710 = sbr.rel (%p708) target = $region48
      $region47: #{net_forward.3} parent=31 // pred_region
        %s711 = smul.u32 36, %s18
        %p712 = scmp.lt.s32.totalorder %s711, 35
        %s713 = scalar_select %p712, %s711, 35
        %s714 = smul.addr %s713, 8
        %s715 = scalar_lea.vmem %s3, %s714
      $region48: #{net_forward.3} parent=31 // pred_fallthru
        _
    $region32: #{net_forward.3} parent=5 // pred_fallthru
      _
    %p716 = scmp.le.s32.totalorder 2, %s9
    // Predicated region
    $region49: #{net_forward.3} parent=5 // pred_check
      %p717 = pneg %p716
    $region50: #{net_forward.3} parent=5 // pred_check_branch
      %719 = sbr.rel (%p717) target = $region52
    $region51: #{net_forward.3} parent=5 // pred_region
      %s720 = ssub.s32 %s9, 2
    $region52: #{net_forward.3} parent=5 // pred_fallthru
      _
  $region6: #{net_forward.3} parent=0 // loop_footer
    %s13 = sadd.s32 1, %s9
  $region7: #{net_forward.3} parent=0 // loop_footer_branch
    %8 = sbr.rel target = $region3
  $region8: #{net_forward.3} parent=0 // loop_exit
    _

// kernel: net_forward.4
$region0: #{net_forward.4}
  #allocation0 [shape = 'u32[]', space=smem, size = 0x4, offset = 0x4, fixed_abs, tag = 'smem constant byte address 0x4 - core index']
  #allocation1 [shape = 'u32[72,128]{1,0:T(1,128)}', space=vmem, size = 0x9000, scoped, tag = 'internal scratch']
  %s0 = inlined_call_operand.vmem [shape: bf16[4,32,256], index: 0, kind: input, shape index: {}]
  %s1 = inlined_call_operand.vmem [shape: bf16[256,128], index: 1, kind: input, shape index: {}]
  %s2 = inlined_call_operand.vmem [shape: f32[1,128], index: 2, kind: input, shape index: {}]
  %s3 = inlined_call_operand.vmem [shape: f32[32,128], index: 3, kind: output, shape index: {}]
  %s4 = sld [smem:[#allocation0]]
  $region53: #{net_forward.4} parent=0
    _
  %s6 = ssub.s32 1, %s4
  %s7 = scalar_select 0, %s6, %s4
  loop: start=0, step=1, limit=6
  $region2: #{net_forward.4} parent=0 // loop_pre_header
    _
  $region3: #{net_forward.4} parent=0 // loop_header
    %s9 = sphi 0, %s13
    %p10 = scmp.ge.s32.totalorder %s9, 6
    %s16 = sphi 0, %s28
    %s17 = sphi 0, %s24
    %s18 = sphi 0, %s16
    %s19 = sphi 0, %s17
    %s20 = sphi 0, %s18
    %s21 = sphi 0, %s19
    %s33 = sphi 0, %s35
    %s36 = sphi 0, %s33
    %s37 = sphi 0, %s36
    %s53 = sphi 0, %s37
    %s57 = sphi 0, %s57
    %s59 = sphi 0, %s57
    %s60 = sphi 0, %s59
    %s74 = sphi 0, %s60
    %s78 = sphi 0, %s78
    %s80 = sphi 0, %s78
    %s81 = sphi 0, %s80
    %s95 = sphi 0, %s81
    %s101 = sphi 0, %s103
    %s104 = sphi 0, %s101
    %s105 = sphi 0, %s104
    %s121 = sphi 0, %s105
  $region4: #{net_forward.4} parent=0 // loop_header_branch
    %12 = sbr.rel (%p10) target = $region8
  $region5: #{net_forward.4} parent=0 // loop_body
    %s14 = ssub.s32 %s9, 1
    %s15 = ssub.s32 %s9, 2
    %s22 = sadd.s32 1, %s17
    %p23 = scmp.ge.s32.totalorder %s22, 4
    %s24 = scalar_select %p23, 0, %s22
    %s25 = sadd.s32 1, %s16
    %s26 = scalar_select %p23, %s25, %s16
    %p27 = scmp.ge.s32.totalorder %s26, 1
    %s28 = scalar_select %p27, 0, %s26
    %s29 = ssub.s32 %s17, %s24
    %s30 = ssub.s32 %s16, %s28
    %s31 = sor.u32 %s29, %s30
    %p32 = scmp.eq.s32.totalorder %s31, 0
    %s34 = sadd.s32 %s33, 1
    %s35 = scalar_select %p32, %s33, %s34
    %p38 = pneg %p32
    %p39 = scmp.eq.s32.totalorder %s9, 3
    %p40 = por %p38, %p39
    %p41 = scmp.ne.s32.totalorder %s33, %s36
    %p42 = scmp.eq.s32.totalorder %s9, 0
    %p43 = por %p41, %p42
    %p44 = scmp.ne.s32.totalorder %s33, %s36
    %p45 = scmp.eq.s32.totalorder %s14, 3
    %p46 = por %p44, %p45
    %p47 = scmp.ne.s32.totalorder %s36, %s37
    %p48 = scmp.eq.s32.totalorder %s14, 0
    %p49 = por %p47, %p48
    %p50 = scmp.ne.s32.totalorder %s36, %s37
    %p51 = scmp.eq.s32.totalorder %s15, 3
    %p52 = por %p50, %p51
    %p54 = scmp.ne.s32.totalorder %s37, %s53
    %p55 = scmp.eq.s32.totalorder %s15, 0
    %p56 = por %p54, %p55
    %s58 = sadd.s32 %s57, 1
    %p61 = scmp.eq.s32.totalorder %s9, 3
    %p62 = scmp.ne.s32.totalorder %s57, %s59
    %p63 = scmp.eq.s32.totalorder %s9, 0
    %p64 = por %p62, %p63
    %p65 = scmp.ne.s32.totalorder %s57, %s59
    %p66 = scmp.eq.s32.totalorder %s14, 3
    %p67 = por %p65, %p66
    %p68 = scmp.ne.s32.totalorder %s59, %s60
    %p69 = scmp.eq.s32.totalorder %s14, 0
    %p70 = por %p68, %p69
    %p71 = scmp.ne.s32.totalorder %s59, %s60
    %p72 = scmp.eq.s32.totalorder %s15, 3
    %p73 = por %p71, %p72
    %p75 = scmp.ne.s32.totalorder %s60, %s74
    %p76 = scmp.eq.s32.totalorder %s15, 0
    %p77 = por %p75, %p76
    %s79 = sadd.s32 %s78, 1
    %p82 = scmp.eq.s32.totalorder %s9, 3
    %p83 = scmp.ne.s32.totalorder %s78, %s80
    %p84 = scmp.eq.s32.totalorder %s9, 0
    %p85 = por %p83, %p84
    %p86 = scmp.ne.s32.totalorder %s78, %s80
    %p87 = scmp.eq.s32.totalorder %s14, 3
    %p88 = por %p86, %p87
    %p89 = scmp.ne.s32.totalorder %s80, %s81
    %p90 = scmp.eq.s32.totalorder %s14, 0
    %p91 = por %p89, %p90
    %p92 = scmp.ne.s32.totalorder %s80, %s81
    %p93 = scmp.eq.s32.totalorder %s15, 3
    %p94 = por %p92, %p93
    %p96 = scmp.ne.s32.totalorder %s81, %s95
    %p97 = scmp.eq.s32.totalorder %s15, 0
    %p98 = por %p96, %p97
    %s99 = ssub.s32 %s16, %s28
    %p100 = scmp.eq.s32.totalorder %s99, 0
    %s102 = sadd.s32 %s101, 1
    %s103 = scalar_select %p100, %s101, %s102
    %p106 = pneg %p100
    %p107 = scmp.eq.s32.totalorder %s9, 3
    %p108 = por %p106, %p107
    %p109 = scmp.ne.s32.totalorder %s101, %s104
    %p110 = scmp.eq.s32.totalorder %s9, 0
    %p111 = por %p109, %p110
    %p112 = scmp.ne.s32.totalorder %s101, %s104
    %p113 = scmp.eq.s32.totalorder %s14, 3
    %p114 = por %p112, %p113
    %p115 = scmp.ne.s32.totalorder %s104, %s105
    %p116 = scmp.eq.s32.totalorder %s14, 0
    %p117 = por %p115, %p116
    %p118 = scmp.ne.s32.totalorder %s104, %s105
    %p119 = scmp.eq.s32.totalorder %s15, 3
    %p120 = por %p118, %p119
    %p122 = scmp.ne.s32.totalorder %s105, %s121
    %p123 = scmp.eq.s32.totalorder %s15, 0
    %p124 = por %p122, %p123
    %p125 = scmp.le.s32.totalorder 1, %s9
    %p126 = scmp.lt.s32.totalorder %s9, 5
    %p127 = pnand %p125, %p126
    %p128 = pneg %p127
    // Predicated region
    $region9: #{net_forward.4} parent=5 // pred_check
      _
    $region10: #{net_forward.4} parent=5 // pred_check_branch
      %130 = sbr.rel (%p127) target = $region12
    $region11: #{net_forward.4} parent=5 // pred_region
      %s131 = ssub.s32 %s9, 1
      // Predicated region
      $region13: #{net_forward.4} parent=11 // pred_check
        %p132 = pneg %p70
      $region14: #{net_forward.4} parent=11 // pred_check_branch
        %134 = sbr.rel (%p132) target = $region16
      $region15: #{net_forward.4} parent=11 // pred_region
        _
      $region16: #{net_forward.4} parent=11 // pred_fallthru
        _
      // Predicated region
      $region17: #{net_forward.4} parent=11 // pred_check
        %p135 = pneg %p91
      $region18: #{net_forward.4} parent=11 // pred_check_branch
        %137 = sbr.rel (%p135) target = $region20
      $region19: #{net_forward.4} parent=11 // pred_region
        _
      $region20: #{net_forward.4} parent=11 // pred_fallthru
        _
    $region12: #{net_forward.4} parent=5 // pred_fallthru
      _
    %p138 = scmp.lt.s32.totalorder %s9, 4
    // Predicated region
    $region21: #{net_forward.4} parent=5 // pred_check
      %p139 = pneg %p138
    $region22: #{net_forward.4} parent=5 // pred_check_branch
      %141 = sbr.rel (%p139) target = $region24
    $region23: #{net_forward.4} parent=5 // pred_region
      // Predicated region
      $region25: #{net_forward.4} parent=23 // pred_check
        %p142 = pneg %p43
      $region26: #{net_forward.4} parent=23 // pred_check_branch
        %144 = sbr.rel (%p142) target = $region28
      $region27: #{net_forward.4} parent=23 // pred_region
        %s145 = smul.u32 4, %s16
        %p146 = scmp.lt.s32.totalorder %s17, 3
        %s147 = scalar_select %p146, %s17, 3
        %p148 = scmp.lt.s32.totalorder %s145, 3
        %s149 = scalar_select %p148, %s145, 3
        %s150 = smul.addr %s149, 2
        %s151 = smul.addr %s147, 8
        %s152 = sadd.s32 %s150, %s151
        %s153 = smul.addr %s152, 4
        %s154 = scalar_lea.vmem %s0, %s153
        %s155 = smul.u32 4, %s16
      $region28: #{net_forward.4} parent=23 // pred_fallthru
        _
    $region24: #{net_forward.4} parent=5 // pred_fallthru
      _
    %p156 = scmp.le.s32.totalorder 1, %s9
    %p157 = scmp.lt.s32.totalorder %s9, 5
    %p158 = pnand %p156, %p157
    %p159 = pneg %p158
    // Predicated region
    $region29: #{net_forward.4} parent=5 // pred_check
      _
    $region30: #{net_forward.4} parent=5 // pred_check_branch
      %161 = sbr.rel (%p158) target = $region32
    $region31: #{net_forward.4} parent=5 // pred_region
      %s162 = ssub.s32 %s9, 1
      %s163 = smul.u32 4, %s18
      %p164 = scmp.lt.s32.totalorder %s19, 3
      %s165 = scalar_select %p164, %s19, 3
      %p166 = scmp.lt.s32.totalorder %s163, 3
      %s167 = scalar_select %p166, %s163, 3
      %s168 = smul.addr %s167, 2
      %s169 = smul.addr %s165, 8
      %s170 = sadd.s32 %s168, %s169
      %s171 = smul.addr %s170, 4
      %s172 = scalar_lea.vmem %s0, %s171
      %p173 = pneg %p49
      %p174 = pneg %p46
      %p175 = pneg %p70
      %p176 = pneg %p67
      %p177 = pneg %p91
      %p178 = pneg %p88
      %p179 = pneg %p117
      %p180 = pneg %p114
      %s181 = smul.u32 4, %s18
      %p182 = scmp.lt.s32.totalorder %s181, 3
      %s183 = scalar_select %p182, %s181, 3
      %s184 = smul.addr %s183, 8
      %s185 = scalar_lea.vmem %s3, %s184
      %s186 = smul.u32 4, %s18
      %p187 = scmp.lt.s32.totalorder %s19, 3
      %s188 = scalar_select %p187, %s19, 3
      %p189 = scmp.lt.s32.totalorder %s186, 3
      %s190 = scalar_select %p189, %s186, 3
      %s191 = smul.addr %s190, 2
      %s192 = smul.addr %s188, 8
      %s193 = sadd.s32 %s191, %s192
      %s194 = smul.addr %s193, 4
      %s195 = scalar_lea.vmem %s0, %s194
      %s196 = smul.u32 4, %s18
      %s197 = smul.u32 4, %s18
      %p198 = scmp.lt.s32.totalorder %s197, 3
      %s199 = scalar_select %p198, %s197, 3
      %s200 = smul.addr %s199, 8
      %s201 = scalar_lea.vmem %s3, %s200
      %s202 = smul.u32 4, %s18
      %v203 = vld [vmem:[%s195] sm:$0xff]
      %v204 = vld [vmem:[%s195 + $0x8] sm:$0xff]
      %v205 = vld [vmem:[%s195 + $0x10] sm:$0xff]
      %v206 = vld [vmem:[%s195 + $0x18] sm:$0xff]
      %v207 = vld [vmem:[%s1] sm:$0xf]
      %v208 = vld [vmem:[%s1 + $0x4] sm:$0xf]
      %v209 = vld [vmem:[%s1 + $0x8] sm:$0xf]
      %v210 = vld [vmem:[%s1 + $0xc] sm:$0xf]
      %v211 = vld [vmem:[%s1 + $0x10] sm:$0xf]
      %v212 = vld [vmem:[%s1 + $0x14] sm:$0xf]
      %v213 = vld [vmem:[%s1 + $0x18] sm:$0xf]
      %v214 = vld [vmem:[%s1 + $0x1c] sm:$0xf]
      %v215 = vld [vmem:[%s1 + $0x20] sm:$0xf]
      %v216 = vld [vmem:[%s1 + $0x24] sm:$0xf]
      %v217 = vld [vmem:[%s1 + $0x28] sm:$0xf]
      %v218 = vld [vmem:[%s1 + $0x2c] sm:$0xf]
      %v219 = vld [vmem:[%s1 + $0x30] sm:$0xf]
      %v220 = vld [vmem:[%s1 + $0x34] sm:$0xf]
      %v221 = vld [vmem:[%s1 + $0x38] sm:$0xf]
      %v222 = vld [vmem:[%s1 + $0x3c] sm:$0xf]
      %v223 = vld [vmem:[%s1 + $0x40] sm:$0xf]
      %v224 = vld [vmem:[%s1 + $0x44] sm:$0xf]
      %v225 = vld [vmem:[%s1 + $0x48] sm:$0xf]
      %v226 = vld [vmem:[%s1 + $0x4c] sm:$0xf]
      %v227 = vld [vmem:[%s1 + $0x50] sm:$0xf]
      %v228 = vld [vmem:[%s1 + $0x54] sm:$0xf]
      %v229 = vld [vmem:[%s1 + $0x58] sm:$0xf]
      %v230 = vld [vmem:[%s1 + $0x5c] sm:$0xf]
      %v231 = vld [vmem:[%s1 + $0x60] sm:$0xf]
      %v232 = vld [vmem:[%s1 + $0x64] sm:$0xf]
      %v233 = vld [vmem:[%s1 + $0x68] sm:$0xf]
      %v234 = vld [vmem:[%s1 + $0x6c] sm:$0xf]
      %v235 = vld [vmem:[%s1 + $0x70] sm:$0xf]
      %v236 = vld [vmem:[%s1 + $0x74] sm:$0xf]
      %v237 = vld [vmem:[%s1 + $0x78] sm:$0xf]
      %v238 = vld [vmem:[%s1 + $0x7c] sm:$0xf]
      %v239 = vld [vmem:[%s2] sm:$0x1]
      %v241 = vperm.slane %v239, 0
      %v247 = vunpack.c.l.b16 %v203
      %v248 = vunpack.c.h.b16 %v203
      %v249 = vunpack.c.l.b16 %v204
      %v250 = vunpack.c.h.b16 %v204
      %v251 = vunpack.c.l.b16 %v205
      %v252 = vunpack.c.h.b16 %v205
      %v253 = vunpack.c.l.b16 %v206
      %v254 = vunpack.c.h.b16 %v206
      %v255 = vpack.c.b16 %v249, %v247
      %v256 = vpack.c.b16 %v250, %v248
      %v257 = vpack.c.b16 %v253, %v251
      %v258 = vpack.c.b16 %v254, %v252
      %v295 = vunpack.c.l.b16 %v207
      %v296 = vunpack.c.l.b16 %v208
      %v297 = vunpack.c.l.b16 %v209
      %v298 = vunpack.c.l.b16 %v210
      %v299 = vunpack.c.l.b16 %v211
      %v300 = vunpack.c.l.b16 %v212
      %v301 = vunpack.c.l.b16 %v213
      %v302 = vunpack.c.l.b16 %v214
      %v303 = vunpack.c.l.b16 %v215
      %v304 = vunpack.c.l.b16 %v216
      %v305 = vunpack.c.l.b16 %v217
      %v306 = vunpack.c.l.b16 %v218
      %v307 = vunpack.c.l.b16 %v219
      %v308 = vunpack.c.l.b16 %v220
      %v309 = vunpack.c.l.b16 %v221
      %v310 = vunpack.c.l.b16 %v222
      %v311 = vunpack.c.l.b16 %v223
      %v312 = vunpack.c.l.b16 %v224
      %v313 = vunpack.c.l.b16 %v225
      %v314 = vunpack.c.l.b16 %v226
      %v315 = vunpack.c.l.b16 %v227
      %v316 = vunpack.c.l.b16 %v228
      %v317 = vunpack.c.l.b16 %v229
      %v318 = vunpack.c.l.b16 %v230
      %v319 = vunpack.c.l.b16 %v231
      %v320 = vunpack.c.l.b16 %v232
      %v321 = vunpack.c.l.b16 %v233
      %v322 = vunpack.c.l.b16 %v234
      %v323 = vunpack.c.l.b16 %v235
      %v324 = vunpack.c.l.b16 %v236
      %v325 = vunpack.c.l.b16 %v237
      %v326 = vunpack.c.l.b16 %v238
      %v327 = vpack.c.b16 %v296, %v295
      %v328 = vpack.c.b16 %v298, %v297
      %v329 = vpack.c.b16 %v300, %v299
      %v330 = vpack.c.b16 %v302, %v301
      %v331 = vpack.c.b16 %v304, %v303
      %v332 = vpack.c.b16 %v306, %v305
      %v333 = vpack.c.b16 %v308, %v307
      %v334 = vpack.c.b16 %v310, %v309
      %v335 = vpack.c.b16 %v312, %v311
      %v336 = vpack.c.b16 %v314, %v313
      %v337 = vpack.c.b16 %v316, %v315
      %v338 = vpack.c.b16 %v318, %v317
      %v339 = vpack.c.b16 %v320, %v319
      %v340 = vpack.c.b16 %v322, %v321
      %v341 = vpack.c.b16 %v324, %v323
      %v342 = vpack.c.b16 %v326, %v325
      %359 = vmatpush.bf16.msra.mxu0 %v334
      %360 = vmatpush.bf16.msra.mxu0 %v333
      %361 = vmatpush.bf16.msra.mxu0 %v332
      %362 = vmatpush.bf16.msra.mxu0 %v331
      %363 = vmatpush.bf16.msra.mxu0 %v330
      %364 = vmatpush.bf16.msra.mxu0 %v329
      %365 = vmatpush.bf16.msra.mxu0 %v328
      %366 = vmatpush.bf16.msra.mxu0 %v327
      %367 = vmatmul.bf16.gmra.mxu0 %v255
      %v368 = vpop.f32.mrf.mxu0
      %v369 = vadd.f32 %v241, %v368
      %v370 = vpop.f32.mrf.mxu0
      %v371 = vadd.f32 %v241, %v370
      %372 = vmatmul.bf16.gmra.mxu0 %v257
      %v373 = vpop.f32.mrf.mxu0
      %v374 = vadd.f32 %v241, %v373
      %v375 = vpop.f32.mrf.mxu0
      %v376 = vadd.f32 %v241, %v375
      %377 = vdwg.mxu0
      %378 = vmatpush.bf16.msra.mxu0 %v342
      %379 = vmatpush.bf16.msra.mxu0 %v341
      %380 = vmatpush.bf16.msra.mxu0 %v340
      %381 = vmatpush.bf16.msra.mxu0 %v339
      %382 = vmatpush.bf16.msra.mxu0 %v338
      %383 = vmatpush.bf16.msra.mxu0 %v337
      %384 = vmatpush.bf16.msra.mxu0 %v336
      %385 = vmatpush.bf16.msra.mxu0 %v335
      %386 = vmatmul.bf16.gmra.mxu0 %v256
      %v387 = vpop.f32.mrf.mxu0
      %v388 = vadd.f32 %v369, %v387
      %v389 = vpop.f32.mrf.mxu0
      %v390 = vadd.f32 %v371, %v389
      %391 = vmatmul.bf16.gmra.mxu0 %v258
      %v392 = vpop.f32.mrf.mxu0
      %v393 = vadd.f32 %v374, %v392
      %v394 = vpop.f32.mrf.mxu0
      %v395 = vadd.f32 %v376, %v394
      %396 = vdwg.mxu0
      %v397 = vmax.f32 %v388, 0.0
      %v398 = vmax.f32 %v390, 0.0
      %v399 = vmax.f32 %v393, 0.0
      %v400 = vmax.f32 %v395, 0.0
      %p401 = scmp.eq.s32.totalorder %s19, 0
      // Predicated region
      $region33: #{net_forward.4} parent=31 // pred_check
        %p402 = pneg %p401
      $region34: #{net_forward.4} parent=31 // pred_check_branch
        %404 = sbr.rel (%p402) target = $region36
      $region35: #{net_forward.4} parent=31 // pred_region
        %405 = vst [vmem:[%s201] sm:$0xff] %v397
        %406 = vst [vmem:[%s201 + $0x8] sm:$0xff] %v398
        %407 = vst [vmem:[%s201 + $0x10] sm:$0xff] %v399
        %408 = vst [vmem:[%s201 + $0x18] sm:$0xff] %v400
      $region36: #{net_forward.4} parent=31 // pred_fallthru
        _
      %p409 = scmp.gt.s32.totalorder %s19, 0
      // Predicated region
      $region37: #{net_forward.4} parent=31 // pred_check
        %p410 = pneg %p409
      $region38: #{net_forward.4} parent=31 // pred_check_branch
        %412 = sbr.rel (%p410) target = $region40
      $region39: #{net_forward.4} parent=31 // pred_region
        %v413 = vld [vmem:[%s201] sm:$0xff]
        %v414 = vld [vmem:[%s201 + $0x8] sm:$0xff]
        %v415 = vld [vmem:[%s201 + $0x10] sm:$0xff]
        %v416 = vld [vmem:[%s201 + $0x18] sm:$0xff]
        %v417 = vmax.f32 %v413, %v397
        %v418 = vmax.f32 %v414, %v398
        %v419 = vmax.f32 %v415, %v399
        %v420 = vmax.f32 %v416, %v400
        %421 = vst [vmem:[%s201] sm:$0xff] %v417
        %422 = vst [vmem:[%s201 + $0x8] sm:$0xff] %v418
        %423 = vst [vmem:[%s201 + $0x10] sm:$0xff] %v419
        %424 = vst [vmem:[%s201 + $0x18] sm:$0xff] %v420
      $region40: #{net_forward.4} parent=31 // pred_fallthru
        _
      %s425 = smul.u32 4, %s18
      %p426 = scmp.lt.s32.totalorder %s425, 3
      %s427 = scalar_select %p426, %s425, 3
      %s428 = smul.addr %s427, 8
      %s429 = scalar_lea.vmem %s3, %s428
      // Predicated region
      $region41: #{net_forward.4} parent=31 // pred_check
        %p430 = pneg %p114
      $region42: #{net_forward.4} parent=31 // pred_check_branch
        %432 = sbr.rel (%p430) target = $region44
      $region43: #{net_forward.4} parent=31 // pred_region
        %s433 = smul.u32 4, %s18
      $region44: #{net_forward.4} parent=31 // pred_fallthru
        _
      // Predicated region
      $region45: #{net_forward.4} parent=31 // pred_check
        %p434 = pneg %p114
      $region46: #{net_forward.4} parent=31 // pred_check_branch
        %436 = sbr.rel (%p434) target = $region48
      $region47: #{net_forward.4} parent=31 // pred_region
        %s437 = smul.u32 4, %s18
        %p438 = scmp.lt.s32.totalorder %s437, 3
        %s439 = scalar_select %p438, %s437, 3
        %s440 = smul.addr %s439, 8
        %s441 = scalar_lea.vmem %s3, %s440
      $region48: #{net_forward.4} parent=31 // pred_fallthru
        _
    $region32: #{net_forward.4} parent=5 // pred_fallthru
      _
    %p442 = scmp.le.s32.totalorder 2, %s9
    // Predicated region
    $region49: #{net_forward.4} parent=5 // pred_check
      %p443 = pneg %p442
    $region50: #{net_forward.4} parent=5 // pred_check_branch
      %445 = sbr.rel (%p443) target = $region52
    $region51: #{net_forward.4} parent=5 // pred_region
      %s446 = ssub.s32 %s9, 2
    $region52: #{net_forward.4} parent=5 // pred_fallthru
      _
  $region6: #{net_forward.4} parent=0 // loop_footer
    %s13 = sadd.s32 1, %s9
  $region7: #{net_forward.4} parent=0 // loop_footer_branch
    %8 = sbr.rel target = $region3
  $region8: #{net_forward.4} parent=0 // loop_exit
    _

// kernel: net_forward.5
$region0: #{net_forward.5}
  #allocation0 [shape = 'u32[]', space=smem, size = 0x4, offset = 0x4, fixed_abs, tag = 'smem constant byte address 0x4 - core index']
  #allocation1 [shape = 'u32[72,128]{1,0:T(1,128)}', space=vmem, size = 0x9000, scoped, tag = 'internal scratch']
  %s0 = inlined_call_operand.vmem [shape: bf16[8,256], index: 0, kind: input, shape index: {}]
  %s1 = inlined_call_operand.vmem [shape: bf16[256,128], index: 1, kind: input, shape index: {}]
  %s2 = inlined_call_operand.vmem [shape: f32[1,128], index: 2, kind: input, shape index: {}]
  %s3 = inlined_call_operand.vmem [shape: bf16[128,128], index: 3, kind: input, shape index: {}]
  %s4 = inlined_call_operand.vmem [shape: f32[1,128], index: 4, kind: input, shape index: {}]
  %s5 = inlined_call_operand.vmem [shape: bf16[128,128], index: 5, kind: input, shape index: {}]
  %s6 = inlined_call_operand.vmem [shape: f32[1,128], index: 6, kind: input, shape index: {}]
  %s7 = inlined_call_operand.vmem [shape: f32[8,128], index: 7, kind: output, shape index: {}]
  %s8 = sld [smem:[#allocation0]]
  $region38: #{net_forward.5} parent=0
    _
  %s10 = ssub.s32 1, %s8
  %s11 = scalar_select 0, %s10, %s8
  // Predicated region
  $region2: #{net_forward.5} parent=0 // pred_check
    _
  $region3: #{net_forward.5} parent=0 // pred_check_branch
    %13 = sbr.rel (0) target = $region5
  $region4: #{net_forward.5} parent=0 // pred_region
    _
  $region5: #{net_forward.5} parent=0 // pred_fallthru
    _
  // Predicated region
  $region6: #{net_forward.5} parent=0 // pred_check
    _
  $region7: #{net_forward.5} parent=0 // pred_check_branch
    %15 = sbr.rel (0) target = $region9
  $region8: #{net_forward.5} parent=0 // pred_region
    _
  $region9: #{net_forward.5} parent=0 // pred_fallthru
    _
  // Predicated region
  $region10: #{net_forward.5} parent=0 // pred_check
    _
  $region11: #{net_forward.5} parent=0 // pred_check_branch
    %17 = sbr.rel (0) target = $region13
  $region12: #{net_forward.5} parent=0 // pred_region
    _
  $region13: #{net_forward.5} parent=0 // pred_fallthru
    _
  // Predicated region
  $region14: #{net_forward.5} parent=0 // pred_check
    _
  $region15: #{net_forward.5} parent=0 // pred_check_branch
    %19 = sbr.rel (0) target = $region17
  $region16: #{net_forward.5} parent=0 // pred_region
    _
  $region17: #{net_forward.5} parent=0 // pred_fallthru
    _
  // Predicated region
  $region18: #{net_forward.5} parent=0 // pred_check
    _
  $region19: #{net_forward.5} parent=0 // pred_check_branch
    %21 = sbr.rel (0) target = $region21
  $region20: #{net_forward.5} parent=0 // pred_region
    _
  $region21: #{net_forward.5} parent=0 // pred_fallthru
    _
  // Predicated region
  $region22: #{net_forward.5} parent=0 // pred_check
    _
  $region23: #{net_forward.5} parent=0 // pred_check_branch
    %23 = sbr.rel (0) target = $region25
  $region24: #{net_forward.5} parent=0 // pred_region
    _
  $region25: #{net_forward.5} parent=0 // pred_fallthru
    _
  // Predicated region
  $region26: #{net_forward.5} parent=0 // pred_check
    _
  $region27: #{net_forward.5} parent=0 // pred_check_branch
    %25 = sbr.rel (0) target = $region29
  $region28: #{net_forward.5} parent=0 // pred_region
    _
  $region29: #{net_forward.5} parent=0 // pred_fallthru
    _
  %v26 = vld [vmem:[%s0] sm:$0xff]
  %v27 = vld [vmem:[%s1] sm:$0xf]
  %v28 = vld [vmem:[%s1 + $0x4] sm:$0xf]
  %v29 = vld [vmem:[%s1 + $0x8] sm:$0xf]
  %v30 = vld [vmem:[%s1 + $0xc] sm:$0xf]
  %v31 = vld [vmem:[%s1 + $0x10] sm:$0xf]
  %v32 = vld [vmem:[%s1 + $0x14] sm:$0xf]
  %v33 = vld [vmem:[%s1 + $0x18] sm:$0xf]
  %v34 = vld [vmem:[%s1 + $0x1c] sm:$0xf]
  %v35 = vld [vmem:[%s1 + $0x20] sm:$0xf]
  %v36 = vld [vmem:[%s1 + $0x24] sm:$0xf]
  %v37 = vld [vmem:[%s1 + $0x28] sm:$0xf]
  %v38 = vld [vmem:[%s1 + $0x2c] sm:$0xf]
  %v39 = vld [vmem:[%s1 + $0x30] sm:$0xf]
  %v40 = vld [vmem:[%s1 + $0x34] sm:$0xf]
  %v41 = vld [vmem:[%s1 + $0x38] sm:$0xf]
  %v42 = vld [vmem:[%s1 + $0x3c] sm:$0xf]
  %v43 = vld [vmem:[%s1 + $0x40] sm:$0xf]
  %v44 = vld [vmem:[%s1 + $0x44] sm:$0xf]
  %v45 = vld [vmem:[%s1 + $0x48] sm:$0xf]
  %v46 = vld [vmem:[%s1 + $0x4c] sm:$0xf]
  %v47 = vld [vmem:[%s1 + $0x50] sm:$0xf]
  %v48 = vld [vmem:[%s1 + $0x54] sm:$0xf]
  %v49 = vld [vmem:[%s1 + $0x58] sm:$0xf]
  %v50 = vld [vmem:[%s1 + $0x5c] sm:$0xf]
  %v51 = vld [vmem:[%s1 + $0x60] sm:$0xf]
  %v52 = vld [vmem:[%s1 + $0x64] sm:$0xf]
  %v53 = vld [vmem:[%s1 + $0x68] sm:$0xf]
  %v54 = vld [vmem:[%s1 + $0x6c] sm:$0xf]
  %v55 = vld [vmem:[%s1 + $0x70] sm:$0xf]
  %v56 = vld [vmem:[%s1 + $0x74] sm:$0xf]
  %v57 = vld [vmem:[%s1 + $0x78] sm:$0xf]
  %v58 = vld [vmem:[%s1 + $0x7c] sm:$0xf]
  %v59 = vld [vmem:[%s2] sm:$0x1]
  %v61 = vperm.slane %v59, 0
  %v64 = vunpack.c.l.b16 %v26
  %v65 = vunpack.c.h.b16 %v26
  %v66 = vpack.c.b16 %v64, %v64
  %v67 = vpack.c.b16 %v65, %v65
  %v102 = vunpack.c.l.b16 %v27
  %v103 = vunpack.c.l.b16 %v28
  %v104 = vunpack.c.l.b16 %v29
  %v105 = vunpack.c.l.b16 %v30
  %v106 = vunpack.c.l.b16 %v31
  %v107 = vunpack.c.l.b16 %v32
  %v108 = vunpack.c.l.b16 %v33
  %v109 = vunpack.c.l.b16 %v34
  %v110 = vunpack.c.l.b16 %v35
  %v111 = vunpack.c.l.b16 %v36
  %v112 = vunpack.c.l.b16 %v37
  %v113 = vunpack.c.l.b16 %v38
  %v114 = vunpack.c.l.b16 %v39
  %v115 = vunpack.c.l.b16 %v40
  %v116 = vunpack.c.l.b16 %v41
  %v117 = vunpack.c.l.b16 %v42
  %v118 = vunpack.c.l.b16 %v43
  %v119 = vunpack.c.l.b16 %v44
  %v120 = vunpack.c.l.b16 %v45
  %v121 = vunpack.c.l.b16 %v46
  %v122 = vunpack.c.l.b16 %v47
  %v123 = vunpack.c.l.b16 %v48
  %v124 = vunpack.c.l.b16 %v49
  %v125 = vunpack.c.l.b16 %v50
  %v126 = vunpack.c.l.b16 %v51
  %v127 = vunpack.c.l.b16 %v52
  %v128 = vunpack.c.l.b16 %v53
  %v129 = vunpack.c.l.b16 %v54
  %v130 = vunpack.c.l.b16 %v55
  %v131 = vunpack.c.l.b16 %v56
  %v132 = vunpack.c.l.b16 %v57
  %v133 = vunpack.c.l.b16 %v58
  %v134 = vpack.c.b16 %v103, %v102
  %v135 = vpack.c.b16 %v105, %v104
  %v136 = vpack.c.b16 %v107, %v106
  %v137 = vpack.c.b16 %v109, %v108
  %v138 = vpack.c.b16 %v111, %v110
  %v139 = vpack.c.b16 %v113, %v112
  %v140 = vpack.c.b16 %v115, %v114
  %v141 = vpack.c.b16 %v117, %v116
  %v142 = vpack.c.b16 %v119, %v118
  %v143 = vpack.c.b16 %v121, %v120
  %v144 = vpack.c.b16 %v123, %v122
  %v145 = vpack.c.b16 %v125, %v124
  %v146 = vpack.c.b16 %v127, %v126
  %v147 = vpack.c.b16 %v129, %v128
  %v148 = vpack.c.b16 %v131, %v130
  %v149 = vpack.c.b16 %v133, %v132
  %166 = vmatpush.bf16.msra.mxu0 %v141
  %167 = vmatpush.bf16.msra.mxu0 %v140
  %168 = vmatpush.bf16.msra.mxu0 %v139
  %169 = vmatpush.bf16.msra.mxu0 %v138
  %170 = vmatpush.bf16.msra.mxu0 %v137
  %171 = vmatpush.bf16.msra.mxu0 %v136
  %172 = vmatpush.bf16.msra.mxu0 %v135
  %173 = vmatpush.bf16.msra.mxu0 %v134
  %174 = vmatmul.bf16.gmra.mxu0 %v66
  %v175 = vpop.f32.mrf.mxu0
  %v176 = vadd.f32 %v61, %v175
  %v177 = vpop.f32.mrf.mxu0
  %178 = vdwg.mxu0
  %179 = vmatpush.bf16.msra.mxu0 %v149
  %180 = vmatpush.bf16.msra.mxu0 %v148
  %181 = vmatpush.bf16.msra.mxu0 %v147
  %182 = vmatpush.bf16.msra.mxu0 %v146
  %183 = vmatpush.bf16.msra.mxu0 %v145
  %184 = vmatpush.bf16.msra.mxu0 %v144
  %185 = vmatpush.bf16.msra.mxu0 %v143
  %186 = vmatpush.bf16.msra.mxu0 %v142
  %187 = vmatmul.bf16.gmra.mxu0 %v67
  %v188 = vpop.f32.mrf.mxu0
  %v189 = vadd.f32 %v176, %v188
  %v190 = vpop.f32.mrf.mxu0
  %191 = vdwg.mxu0
  %v192 = vmax.f32 %v189, 0.0
  %v193 = vpack.c.bf16 %v192, %v192
  %v194 = vld [vmem:[%s3] sm:$0xf]
  %v195 = vld [vmem:[%s3 + $0x4] sm:$0xf]
  %v196 = vld [vmem:[%s3 + $0x8] sm:$0xf]
  %v197 = vld [vmem:[%s3 + $0xc] sm:$0xf]
  %v198 = vld [vmem:[%s3 + $0x10] sm:$0xf]
  %v199 = vld [vmem:[%s3 + $0x14] sm:$0xf]
  %v200 = vld [vmem:[%s3 + $0x18] sm:$0xf]
  %v201 = vld [vmem:[%s3 + $0x1c] sm:$0xf]
  %v202 = vld [vmem:[%s3 + $0x20] sm:$0xf]
  %v203 = vld [vmem:[%s3 + $0x24] sm:$0xf]
  %v204 = vld [vmem:[%s3 + $0x28] sm:$0xf]
  %v205 = vld [vmem:[%s3 + $0x2c] sm:$0xf]
  %v206 = vld [vmem:[%s3 + $0x30] sm:$0xf]
  %v207 = vld [vmem:[%s3 + $0x34] sm:$0xf]
  %v208 = vld [vmem:[%s3 + $0x38] sm:$0xf]
  %v209 = vld [vmem:[%s3 + $0x3c] sm:$0xf]
  %v210 = vld [vmem:[%s4] sm:$0x1]
  %v212 = vperm.slane %v210, 0
  %v230 = vunpack.c.l.b16 %v194
  %v231 = vunpack.c.l.b16 %v195
  %v232 = vunpack.c.l.b16 %v196
  %v233 = vunpack.c.l.b16 %v197
  %v234 = vunpack.c.l.b16 %v198
  %v235 = vunpack.c.l.b16 %v199
  %v236 = vunpack.c.l.b16 %v200
  %v237 = vunpack.c.l.b16 %v201
  %v238 = vunpack.c.l.b16 %v202
  %v239 = vunpack.c.l.b16 %v203
  %v240 = vunpack.c.l.b16 %v204
  %v241 = vunpack.c.l.b16 %v205
  %v242 = vunpack.c.l.b16 %v206
  %v243 = vunpack.c.l.b16 %v207
  %v244 = vunpack.c.l.b16 %v208
  %v245 = vunpack.c.l.b16 %v209
  %v246 = vpack.c.b16 %v231, %v230
  %v247 = vpack.c.b16 %v233, %v232
  %v248 = vpack.c.b16 %v235, %v234
  %v249 = vpack.c.b16 %v237, %v236
  %v250 = vpack.c.b16 %v239, %v238
  %v251 = vpack.c.b16 %v241, %v240
  %v252 = vpack.c.b16 %v243, %v242
  %v253 = vpack.c.b16 %v245, %v244
  %262 = vmatpush.bf16.msra.mxu0 %v253
  %263 = vmatpush.bf16.msra.mxu0 %v252
  %264 = vmatpush.bf16.msra.mxu0 %v251
  %265 = vmatpush.bf16.msra.mxu0 %v250
  %266 = vmatpush.bf16.msra.mxu0 %v249
  %267 = vmatpush.bf16.msra.mxu0 %v248
  %268 = vmatpush.bf16.msra.mxu0 %v247
  %269 = vmatpush.bf16.msra.mxu0 %v246
  %270 = vmatmul.bf16.gmra.mxu0 %v193
  %v271 = vpop.f32.mrf.mxu0
  %v272 = vadd.f32 %v212, %v271
  %v273 = vpop.f32.mrf.mxu0
  %274 = vdwg.mxu0
  %v275 = vmax.f32 %v272, 0.0
  %v276 = vpack.c.bf16 %v275, %v275
  %v277 = vld [vmem:[%s5] sm:$0xf]
  %v278 = vld [vmem:[%s5 + $0x4] sm:$0xf]
  %v279 = vld [vmem:[%s5 + $0x8] sm:$0xf]
  %v280 = vld [vmem:[%s5 + $0xc] sm:$0xf]
  %v281 = vld [vmem:[%s5 + $0x10] sm:$0xf]
  %v282 = vld [vmem:[%s5 + $0x14] sm:$0xf]
  %v283 = vld [vmem:[%s5 + $0x18] sm:$0xf]
  %v284 = vld [vmem:[%s5 + $0x1c] sm:$0xf]
  %v285 = vld [vmem:[%s5 + $0x20] sm:$0xf]
  %v286 = vld [vmem:[%s5 + $0x24] sm:$0xf]
  %v287 = vld [vmem:[%s5 + $0x28] sm:$0xf]
  %v288 = vld [vmem:[%s5 + $0x2c] sm:$0xf]
  %v289 = vld [vmem:[%s5 + $0x30] sm:$0xf]
  %v290 = vld [vmem:[%s5 + $0x34] sm:$0xf]
  %v291 = vld [vmem:[%s5 + $0x38] sm:$0xf]
  %v292 = vld [vmem:[%s5 + $0x3c] sm:$0xf]
  %v293 = vld [vmem:[%s6] sm:$0x1]
  %v295 = vperm.slane %v293, 0
  %v313 = vunpack.c.l.b16 %v277
  %v314 = vunpack.c.l.b16 %v278
  %v315 = vunpack.c.l.b16 %v279
  %v316 = vunpack.c.l.b16 %v280
  %v317 = vunpack.c.l.b16 %v281
  %v318 = vunpack.c.l.b16 %v282
  %v319 = vunpack.c.l.b16 %v283
  %v320 = vunpack.c.l.b16 %v284
  %v321 = vunpack.c.l.b16 %v285
  %v322 = vunpack.c.l.b16 %v286
  %v323 = vunpack.c.l.b16 %v287
  %v324 = vunpack.c.l.b16 %v288
  %v325 = vunpack.c.l.b16 %v289
  %v326 = vunpack.c.l.b16 %v290
  %v327 = vunpack.c.l.b16 %v291
  %v328 = vunpack.c.l.b16 %v292
  %v329 = vpack.c.b16 %v314, %v313
  %v330 = vpack.c.b16 %v316, %v315
  %v331 = vpack.c.b16 %v318, %v317
  %v332 = vpack.c.b16 %v320, %v319
  %v333 = vpack.c.b16 %v322, %v321
  %v334 = vpack.c.b16 %v324, %v323
  %v335 = vpack.c.b16 %v326, %v325
  %v336 = vpack.c.b16 %v328, %v327
  %345 = vmatpush.bf16.msra.mxu0 %v336
  %346 = vmatpush.bf16.msra.mxu0 %v335
  %347 = vmatpush.bf16.msra.mxu0 %v334
  %348 = vmatpush.bf16.msra.mxu0 %v333
  %349 = vmatpush.bf16.msra.mxu0 %v332
  %350 = vmatpush.bf16.msra.mxu0 %v331
  %351 = vmatpush.bf16.msra.mxu0 %v330
  %352 = vmatpush.bf16.msra.mxu0 %v329
  %353 = vmatmul.bf16.gmra.mxu0 %v276
  %v354 = vpop.f32.mrf.mxu0
  %v355 = vadd.f32 %v295, %v354
  %v356 = vpop.f32.mrf.mxu0
  %357 = vdwg.mxu0
  %v358 = vmax.f32 %v355, 0.0
  %359 = vst [vmem:[%s7] sm:$0xff] %v358
  // Predicated region
  $region30: #{net_forward.5} parent=0 // pred_check
    _
  $region31: #{net_forward.5} parent=0 // pred_check_branch
    %361 = sbr.rel (0) target = $region33
  $region32: #{net_forward.5} parent=0 // pred_region
    _
  $region33: #{net_forward.5} parent=0 // pred_fallthru
    _
  // Predicated region
  $region34: #{net_forward.5} parent=0 // pred_check
    _
  $region35: #{net_forward.5} parent=0 // pred_check_branch
    %363 = sbr.rel (0) target = $region37
  $region36: #{net_forward.5} parent=0 // pred_region
    _
  $region37: #{net_forward.5} parent=0 // pred_fallthru
    _

</llo_original>
